<compile_context>
chip_gen: v7x
topology: tpu7x:2x2x1
jax: 0.10.0
libtpu: 0.0.40
codegen_flags: <defaults>
</compile_context>

<pallas_src>
import jax
import jax.numpy as jnp
from jax.experimental import pallas as pl
from jax.experimental.pallas import tpu as pltpu

BN_EPS = 1e-5


# ---------------------------------------------------------------------------
# Fused kernel: y-branch (once per batch) + per-tile MLP over points
# ---------------------------------------------------------------------------
def classify2_kernel(x_ref, y_ref, w00_ref, b00_ref, w01_ref, b01_ref,
                     w1x_ref, w1y_ref, b1_ref, w2_ref, b2_ref, w3_ref,
                     out_ref, yterm_ref):
    # x block: (1, C, TN); y block: (1, C, N) (same block index across the
    # tile axis -> stays resident, no re-DMA); biases / w3 are column vectors
    # (Cout, 1); yterm_ref is a (256, 1) VMEM scratch holding
    #   W1y_folded @ max_n(y-branch) + b1   for the current batch.

    @pl.when(pl.program_id(1) == 0)
    def _():
        y = y_ref[0]                                                    # (C, N)
        h = jnp.dot(w00_ref[...], y, preferred_element_type=jnp.float32)
        h = jnp.maximum(h + b00_ref[...], 0.0)                          # (C, N)
        h = jnp.dot(w01_ref[...], h, preferred_element_type=jnp.float32)
        h = jnp.maximum(h + b01_ref[...], 0.0)                          # (C, N)
        ymax = jnp.max(h, axis=-1, keepdims=True)                       # (C, 1)
        yterm_ref[...] = (
            jnp.dot(w1y_ref[...], ymax, preferred_element_type=jnp.float32)
            + b1_ref[...])                                              # (256, 1)

    xt = x_ref[0]                                                       # (C, TN)
    h1 = jnp.dot(w1x_ref[...], xt, preferred_element_type=jnp.float32)
    h1 = jnp.maximum(h1 + yterm_ref[...], 0.0)                          # (256, TN)
    h2 = jnp.dot(w2_ref[...], h1, preferred_element_type=jnp.float32)
    h2 = jnp.maximum(h2 + b2_ref[...], 0.0)                             # (128, TN)
    # conv3 (1x1, Cout=1): VPU multiply + sublane reduce (no M=1 MXU matmul).
    logits = jnp.sum(h2 * w3_ref[...], axis=0, keepdims=True)           # (1, TN)
    out_ref[0] = jax.nn.sigmoid(logits)


# ---------------------------------------------------------------------------
# Parameters & BN folding (deterministic init, no checkpoint)
# ---------------------------------------------------------------------------
def init_params(key, emb_dims):
    C = emb_dims
    ks = iter(jax.random.split(key, 32))

    def conv_w(cout, cin):
        return (jax.random.normal(next(ks), (cout, cin), jnp.float32)
                / jnp.sqrt(cin).astype(jnp.float32))

    p = {"w00": conv_w(C, C), "w01": conv_w(C, C),
         "w1": conv_w(256, 2 * C), "w2": conv_w(128, 256), "w3": conv_w(1, 128)}
    for name, c in (("00", C), ("01", C), ("1", 256), ("2", 128)):
        p[f"g{name}"] = 1.0 + 0.1 * jax.random.normal(next(ks), (c,), jnp.float32)
        p[f"be{name}"] = 0.1 * jax.random.normal(next(ks), (c,), jnp.float32)
        p[f"m{name}"] = 0.1 * jax.random.normal(next(ks), (c,), jnp.float32)
        p[f"v{name}"] = 0.5 + jnp.abs(jax.random.normal(next(ks), (c,), jnp.float32))
    return p


def fold_bn(p):
    def fold(w, g, be, m, v):
        s = g / jnp.sqrt(v + BN_EPS)
        # folded weight (Cout, Cin), folded bias as a COLUMN (Cout, 1)
        return w * s[:, None], (be - s * m)[:, None]

    w00f, b00 = fold(p["w00"], p["g00"], p["be00"], p["m00"], p["v00"])
    w01f, b01 = fold(p["w01"], p["g01"], p["be01"], p["m01"], p["v01"])
    w1f, b1 = fold(p["w1"], p["g1"], p["be1"], p["m1"], p["v1"])
    C = p["w00"].shape[0]
    w1xf, w1yf = w1f[:, :C], w1f[:, C:]    # torch cat order: (x, y-branch-max)
    w2f, b2 = fold(p["w2"], p["g2"], p["be2"], p["m2"], p["v2"])
    w3col = jnp.transpose(p["w3"])         # (128, 1) column
    return w00f, b00, w01f, b01, w1xf, w1yf, b1, w2f, b2, w3col


# ---------------------------------------------------------------------------
# Forward (Pallas) and pure-JAX reference
# ---------------------------------------------------------------------------
def _pick_tile_n(n):
    for t in (512, 256, 128):
        if n % t == 0:
            return t
    return n                               # single tile per batch


def classify2_forward(x, y, params, *, tile_n=None):
    B, C, N = x.shape
    if tile_n is None or N % tile_n != 0:
        tile_n = _pick_tile_n(N)
    n_tiles = N // tile_n
    w00f, b00, w01f, b01, w1xf, w1yf, b1, w2f, b2, w3col = fold_bn(params)

    def rep(a):                            # full, replicated block for params
        return pl.BlockSpec(a.shape, lambda b, t, _nd=a.ndim: (0,) * _nd)

    out = pl.pallas_call(
        classify2_kernel,
        out_shape=jax.ShapeDtypeStruct((B, 1, N), jnp.float32),
        grid=(B, n_tiles),
        in_specs=[
            pl.BlockSpec((1, C, tile_n), lambda b, t: (b, 0, t)),   # x tile
            pl.BlockSpec((1, C, N), lambda b, t: (b, 0, 0)),        # full y (resident)
            rep(w00f), rep(b00), rep(w01f), rep(b01),
            rep(w1xf), rep(w1yf), rep(b1), rep(w2f), rep(b2), rep(w3col),
        ],
        out_specs=pl.BlockSpec((1, 1, tile_n), lambda b, t: (b, 0, t)),
        scratch_shapes=[pltpu.VMEM((256, 1), jnp.float32)],
        compiler_params=pltpu.CompilerParams(
            dimension_semantics=("parallel", "arbitrary"),
            vmem_limit_bytes=48 * 1024 * 1024),
    )(x, y, w00f, b00, w01f, b01, w1xf, w1yf, b1, w2f, b2, w3col)

    # lane-dense (B, 1, N) -> torch's (B, N, 1); middle dim is 1 so this
    # reshape is free and equivalent to permute(0, 2, 1).
    return out.reshape(B, N, 1)


def reference_forward(x, y, params):
    def bn(h, pre):
        g, be, m, v = (params[f"g{pre}"], params[f"be{pre}"],
                       params[f"m{pre}"], params[f"v{pre}"])
        inv = g / jnp.sqrt(v + BN_EPS)
        return inv[None, :, None] * (h - m[None, :, None]) + be[None, :, None]

    B, C, N = x.shape
    h = jax.nn.relu(bn(jnp.einsum("oc,bcn->bon", params["w00"], y), "00"))
    h = jax.nn.relu(bn(jnp.einsum("oc,bcn->bon", params["w01"], h), "01"))
    ymax = jnp.max(h, axis=2, keepdims=True)                       # (B, C, 1)
    cat = jnp.concatenate([x, jnp.broadcast_to(ymax, (B, C, N))], axis=1)
    h = jax.nn.relu(bn(jnp.einsum("oc,bcn->bon", params["w1"], cat), "1"))
    h = jax.nn.relu(bn(jnp.einsum("oc,bcn->bon", params["w2"], h), "2"))
    logits = jnp.einsum("oc,bcn->bon", params["w3"], h)            # (B, 1, N)
    return jnp.transpose(jax.nn.sigmoid(logits), (0, 2, 1))        # (B, N, 1)


if __name__ == "__main__":
    B, EMB, N = 2, 128, 256          # small emb_dims; N = one 256-point tile
    key = jax.random.PRNGKey(0)
    kx, ky, kp = jax.random.split(key, 3)
    x = jax.random.normal(kx, (B, EMB, N), jnp.float32)
    y = jax.random.normal(ky, (B, EMB, N), jnp.float32)
    params = init_params(kp, EMB)

    out = jax.block_until_ready(classify2_forward(x, y, params))
    ref = reference_forward(x, y, params)

    assert out.shape == (B, N, 1)
    assert not bool(jnp.any(jnp.isnan(out)))
    max_err = float(jnp.max(jnp.abs(out - ref)))
    assert bool(jnp.allclose(out, ref, atol=5e-5, rtol=1e-4)), max_err
    print("KERNEL_OK")
</pallas_src>

<mosaic_0001>
module attributes {stable_mosaic.version = 11 : i64} {
  func.func @classify2_kernel(%arg0: i32, %arg1: i32, %arg2: memref<1x128x256xf32, #tpu.memory_space<vmem>>, %arg3: memref<1x128x256xf32, #tpu.memory_space<vmem>>, %arg4: memref<128x128xf32, #tpu.memory_space<vmem>>, %arg5: memref<128x1xf32, #tpu.memory_space<vmem>>, %arg6: memref<128x128xf32, #tpu.memory_space<vmem>>, %arg7: memref<128x1xf32, #tpu.memory_space<vmem>>, %arg8: memref<256x128xf32, #tpu.memory_space<vmem>>, %arg9: memref<256x128xf32, #tpu.memory_space<vmem>>, %arg10: memref<256x1xf32, #tpu.memory_space<vmem>>, %arg11: memref<128x256xf32, #tpu.memory_space<vmem>>, %arg12: memref<128x1xf32, #tpu.memory_space<vmem>>, %arg13: memref<128x1xf32, #tpu.memory_space<vmem>>, %arg14: memref<1x1x256xf32, #tpu.memory_space<vmem>>, %arg15: memref<256x1xf32, #tpu.memory_space<vmem>>) attributes {dimension_semantics = [#tpu.dimension_semantics<parallel>, #tpu.dimension_semantics<arbitrary>], iteration_bounds = array<i64: 2, 1>, scalar_prefetch = 0 : i64, scratch_operands = 1 : i64, tpu.core_type = #tpu.core_type<tc>, window_params = [{transform_indices = @transform_0, window_bounds = array<i64: 1, 128, 256>}, {transform_indices = @transform_1, window_bounds = array<i64: 1, 128, 256>}, {pipeline_mode = #tpu.pipeline_mode<synchronous>, transform_indices = @transform_2, window_bounds = array<i64: 128, 128>}, {pipeline_mode = #tpu.pipeline_mode<synchronous>, transform_indices = @transform_3, window_bounds = array<i64: 128, 1>}, {pipeline_mode = #tpu.pipeline_mode<synchronous>, transform_indices = @transform_4, window_bounds = array<i64: 128, 128>}, {pipeline_mode = #tpu.pipeline_mode<synchronous>, transform_indices = @transform_5, window_bounds = array<i64: 128, 1>}, {pipeline_mode = #tpu.pipeline_mode<synchronous>, transform_indices = @transform_6, window_bounds = array<i64: 256, 128>}, {pipeline_mode = #tpu.pipeline_mode<synchronous>, transform_indices = @transform_7, window_bounds = array<i64: 256, 128>}, {pipeline_mode = #tpu.pipeline_mode<synchronous>, transform_indices = @transform_8, window_bounds = array<i64: 256, 1>}, {pipeline_mode = #tpu.pipeline_mode<synchronous>, transform_indices = @transform_9, window_bounds = array<i64: 128, 256>}, {pipeline_mode = #tpu.pipeline_mode<synchronous>, transform_indices = @transform_10, window_bounds = array<i64: 128, 1>}, {pipeline_mode = #tpu.pipeline_mode<synchronous>, transform_indices = @transform_11, window_bounds = array<i64: 128, 1>}, {transform_indices = @transform_12, window_bounds = array<i64: 1, 1, 256>}]} {
    %c0_i32 = arith.constant 0 : i32
    %0 = arith.cmpi eq, %arg1, %c0_i32 : i32
    %1 = arith.extui %0 : i1 to i32
    %c0_i32_0 = arith.constant 0 : i32
    %2 = arith.cmpi ne, %1, %c0_i32_0 : i32
    scf.if %2 {
      %c0_21 = arith.constant 0 : index
      %c0_22 = arith.constant 0 : index
      %c0_23 = arith.constant 0 : index
      %32 = vector.load %arg3[%c0_21, %c0_22, %c0_23] : memref<1x128x256xf32, #tpu.memory_space<vmem>>, vector<1x128x256xf32>
      %33 = vector.shape_cast %32 : vector<1x128x256xf32> to vector<128x256xf32>
      %c0_24 = arith.constant 0 : index
      %c0_25 = arith.constant 0 : index
      %34 = vector.load %arg4[%c0_24, %c0_25] : memref<128x128xf32, #tpu.memory_space<vmem>>, vector<128x128xf32>
      %cst_26 = arith.constant dense<0.000000e+00> : vector<128x256xf32>
      %35 = tpu.matmul %34, %33, %cst_26 {dimension_numbers = #tpu.dot_dimension_numbers<[1], [0], [0], [1], [0, 0, 1, 1], [], []>} : vector<128x128xf32>, vector<128x256xf32>, vector<128x256xf32> -> vector<128x256xf32>
      %c0_27 = arith.constant 0 : index
      %c0_28 = arith.constant 0 : index
      %36 = vector.load %arg5[%c0_27, %c0_28] : memref<128x1xf32, #tpu.memory_space<vmem>>, vector<128x1xf32>
      %37 = vector.broadcast %36 : vector<128x1xf32> to vector<128x256xf32>
      %38 = arith.addf %35, %37 : vector<128x256xf32>
      %cst_29 = arith.constant 0.000000e+00 : f32
      %39 = vector.broadcast %cst_29 : f32 to vector<128x256xf32>
      %40 = arith.maximumf %38, %39 : vector<128x256xf32>
      %c0_30 = arith.constant 0 : index
      %c0_31 = arith.constant 0 : index
      %41 = vector.load %arg6[%c0_30, %c0_31] : memref<128x128xf32, #tpu.memory_space<vmem>>, vector<128x128xf32>
      %cst_32 = arith.constant dense<0.000000e+00> : vector<128x256xf32>
      %42 = tpu.matmul %41, %40, %cst_32 {dimension_numbers = #tpu.dot_dimension_numbers<[1], [0], [0], [1], [0, 0, 1, 1], [], []>} : vector<128x128xf32>, vector<128x256xf32>, vector<128x256xf32> -> vector<128x256xf32>
      %c0_33 = arith.constant 0 : index
      %c0_34 = arith.constant 0 : index
      %43 = vector.load %arg7[%c0_33, %c0_34] : memref<128x1xf32, #tpu.memory_space<vmem>>, vector<128x1xf32>
      %44 = vector.broadcast %43 : vector<128x1xf32> to vector<128x256xf32>
      %45 = arith.addf %42, %44 : vector<128x256xf32>
      %cst_35 = arith.constant 0.000000e+00 : f32
      %46 = vector.broadcast %cst_35 : f32 to vector<128x256xf32>
      %47 = arith.maximumf %45, %46 : vector<128x256xf32>
      %cst_36 = arith.constant dense<0xFF800000> : vector<128xf32>
      %48 = vector.multi_reduction <maximumf>, %47, %cst_36 [1] : vector<128x256xf32> to vector<128xf32>
      %49 = vector.shape_cast %48 : vector<128xf32> to vector<128x1xf32>
      %c0_37 = arith.constant 0 : index
      %c0_38 = arith.constant 0 : index
      %50 = vector.load %arg9[%c0_37, %c0_38] : memref<256x128xf32, #tpu.memory_space<vmem>>, vector<256x128xf32>
      %cst_39 = arith.constant dense<0.000000e+00> : vector<256x1xf32>
      %51 = tpu.matmul %50, %49, %cst_39 {dimension_numbers = #tpu.dot_dimension_numbers<[1], [0], [0], [1], [0, 0, 1, 1], [], []>} : vector<256x128xf32>, vector<128x1xf32>, vector<256x1xf32> -> vector<256x1xf32>
      %c0_40 = arith.constant 0 : index
      %c0_41 = arith.constant 0 : index
      %52 = vector.load %arg10[%c0_40, %c0_41] : memref<256x1xf32, #tpu.memory_space<vmem>>, vector<256x1xf32>
      %53 = arith.addf %51, %52 : vector<256x1xf32>
      %c0_42 = arith.constant 0 : index
      %c0_43 = arith.constant 0 : index
      %54 = vector.load %arg15[%c0_42, %c0_43] : memref<256x1xf32, #tpu.memory_space<vmem>>, vector<256x1xf32>
      tpu.vector_store %arg15[%c0_42, %c0_43], %53 {strides = array<i32>} : memref<256x1xf32, #tpu.memory_space<vmem>>, vector<256x1xf32>,
    } else {
    }
    %c0 = arith.constant 0 : index
    %c0_1 = arith.constant 0 : index
    %c0_2 = arith.constant 0 : index
    %3 = vector.load %arg2[%c0, %c0_1, %c0_2] : memref<1x128x256xf32, #tpu.memory_space<vmem>>, vector<1x128x256xf32>
    %4 = vector.shape_cast %3 : vector<1x128x256xf32> to vector<128x256xf32>
    %c0_3 = arith.constant 0 : index
    %c0_4 = arith.constant 0 : index
    %5 = vector.load %arg8[%c0_3, %c0_4] : memref<256x128xf32, #tpu.memory_space<vmem>>, vector<256x128xf32>
    %cst = arith.constant dense<0.000000e+00> : vector<256x256xf32>
    %6 = tpu.matmul %5, %4, %cst {dimension_numbers = #tpu.dot_dimension_numbers<[1], [0], [0], [1], [0, 0, 1, 1], [], []>} : vector<256x128xf32>, vector<128x256xf32>, vector<256x256xf32> -> vector<256x256xf32>
    %c0_5 = arith.constant 0 : index
    %c0_6 = arith.constant 0 : index
    %7 = vector.load %arg15[%c0_5, %c0_6] : memref<256x1xf32, #tpu.memory_space<vmem>>, vector<256x1xf32>
    %8 = vector.broadcast %7 : vector<256x1xf32> to vector<256x256xf32>
    %9 = arith.addf %6, %8 : vector<256x256xf32>
    %cst_7 = arith.constant 0.000000e+00 : f32
    %10 = vector.broadcast %cst_7 : f32 to vector<256x256xf32>
    %11 = arith.maximumf %9, %10 : vector<256x256xf32>
    %c0_8 = arith.constant 0 : index
    %c0_9 = arith.constant 0 : index
    %12 = vector.load %arg11[%c0_8, %c0_9] : memref<128x256xf32, #tpu.memory_space<vmem>>, vector<128x256xf32>
    %cst_10 = arith.constant dense<0.000000e+00> : vector<128x256xf32>
    %13 = tpu.matmul %12, %11, %cst_10 {dimension_numbers = #tpu.dot_dimension_numbers<[1], [0], [0], [1], [0, 0, 1, 1], [], []>} : vector<128x256xf32>, vector<256x256xf32>, vector<128x256xf32> -> vector<128x256xf32>
    %c0_11 = arith.constant 0 : index
    %c0_12 = arith.constant 0 : index
    %14 = vector.load %arg12[%c0_11, %c0_12] : memref<128x1xf32, #tpu.memory_space<vmem>>, vector<128x1xf32>
    %15 = vector.broadcast %14 : vector<128x1xf32> to vector<128x256xf32>
    %16 = arith.addf %13, %15 : vector<128x256xf32>
    %cst_13 = arith.constant 0.000000e+00 : f32
    %17 = vector.broadcast %cst_13 : f32 to vector<128x256xf32>
    %18 = arith.maximumf %16, %17 : vector<128x256xf32>
    %c0_14 = arith.constant 0 : index
    %c0_15 = arith.constant 0 : index
    %19 = vector.load %arg13[%c0_14, %c0_15] : memref<128x1xf32, #tpu.memory_space<vmem>>, vector<128x1xf32>
    %20 = vector.broadcast %19 : vector<128x1xf32> to vector<128x256xf32>
    %21 = arith.mulf %18, %20 : vector<128x256xf32>
    %cst_16 = arith.constant dense<0.000000e+00> : vector<256xf32>
    %22 = vector.multi_reduction <add>, %21, %cst_16 [0] : vector<128x256xf32> to vector<256xf32>
    %23 = vector.shape_cast %22 : vector<256xf32> to vector<1x256xf32>
    %24 = arith.negf %23 : vector<1x256xf32>
    %25 = math.exp %24 : vector<1x256xf32>
    %cst_17 = arith.constant 1.000000e+00 : f32
    %26 = vector.broadcast %cst_17 : f32 to vector<1x256xf32>
    %27 = arith.addf %26, %25 : vector<1x256xf32>
    %28 = arith.divf %26, %27 : vector<1x256xf32>
    %c0_18 = arith.constant 0 : index
    %c0_19 = arith.constant 0 : index
    %c0_20 = arith.constant 0 : index
    %29 = vector.load %arg14[%c0_18, %c0_19, %c0_20] : memref<1x1x256xf32, #tpu.memory_space<vmem>>, vector<1x1x256xf32>
    %30 = vector.shape_cast %29 : vector<1x1x256xf32> to vector<1x256xf32>
    %31 = vector.shape_cast %28 : vector<1x256xf32> to vector<1x1x256xf32>
    tpu.vector_store %arg14[%c0_18, %c0_19, %c0_20], %31 {strides = array<i32>} : memref<1x1x256xf32, #tpu.memory_space<vmem>>, vector<1x1x256xf32>,
    return
  }
  func.func @transform_0(%arg0: i32, %arg1: i32) -> (i32, i32, i32) {
    %c0_i32 = arith.constant 0 : i32
    %c0_i32_0 = arith.constant 0 : i32
    return %arg0, %c0_i32, %arg1 : i32, i32, i32
  }
  func.func @transform_1(%arg0: i32, %arg1: i32) -> (i32, i32, i32) {
    %c0_i32 = arith.constant 0 : i32
    %c0_i32_0 = arith.constant 0 : i32
    %c0_i32_1 = arith.constant 0 : i32
    return %arg0, %c0_i32, %c0_i32_0 : i32, i32, i32
  }
  func.func @transform_2(%arg0: i32, %arg1: i32) -> (i32, i32) {
    %c0_i32 = arith.constant 0 : i32
    %c0_i32_0 = arith.constant 0 : i32
    %c0_i32_1 = arith.constant 0 : i32
    return %c0_i32, %c0_i32_0 : i32, i32
  }
  func.func @transform_3(%arg0: i32, %arg1: i32) -> (i32, i32) {
    %c0_i32 = arith.constant 0 : i32
    %c0_i32_0 = arith.constant 0 : i32
    %c0_i32_1 = arith.constant 0 : i32
    return %c0_i32, %c0_i32_0 : i32, i32
  }
  func.func @transform_4(%arg0: i32, %arg1: i32) -> (i32, i32) {
    %c0_i32 = arith.constant 0 : i32
    %c0_i32_0 = arith.constant 0 : i32
    %c0_i32_1 = arith.constant 0 : i32
    return %c0_i32, %c0_i32_0 : i32, i32
  }
  func.func @transform_5(%arg0: i32, %arg1: i32) -> (i32, i32) {
    %c0_i32 = arith.constant 0 : i32
    %c0_i32_0 = arith.constant 0 : i32
    %c0_i32_1 = arith.constant 0 : i32
    return %c0_i32, %c0_i32_0 : i32, i32
  }
  func.func @transform_6(%arg0: i32, %arg1: i32) -> (i32, i32) {
    %c0_i32 = arith.constant 0 : i32
    %c0_i32_0 = arith.constant 0 : i32
    %c0_i32_1 = arith.constant 0 : i32
    return %c0_i32, %c0_i32_0 : i32, i32
  }
  func.func @transform_7(%arg0: i32, %arg1: i32) -> (i32, i32) {
    %c0_i32 = arith.constant 0 : i32
    %c0_i32_0 = arith.constant 0 : i32
    %c0_i32_1 = arith.constant 0 : i32
    return %c0_i32, %c0_i32_0 : i32, i32
  }
  func.func @transform_8(%arg0: i32, %arg1: i32) -> (i32, i32) {
    %c0_i32 = arith.constant 0 : i32
    %c0_i32_0 = arith.constant 0 : i32
    %c0_i32_1 = arith.constant 0 : i32
    return %c0_i32, %c0_i32_0 : i32, i32
  }
  func.func @transform_9(%arg0: i32, %arg1: i32) -> (i32, i32) {
    %c0_i32 = arith.constant 0 : i32
    %c0_i32_0 = arith.constant 0 : i32
    %c0_i32_1 = arith.constant 0 : i32
    return %c0_i32, %c0_i32_0 : i32, i32
  }
  func.func @transform_10(%arg0: i32, %arg1: i32) -> (i32, i32) {
    %c0_i32 = arith.constant 0 : i32
    %c0_i32_0 = arith.constant 0 : i32
    %c0_i32_1 = arith.constant 0 : i32
    return %c0_i32, %c0_i32_0 : i32, i32
  }
  func.func @transform_11(%arg0: i32, %arg1: i32) -> (i32, i32) {
    %c0_i32 = arith.constant 0 : i32
    %c0_i32_0 = arith.constant 0 : i32
    %c0_i32_1 = arith.constant 0 : i32
    return %c0_i32, %c0_i32_0 : i32, i32
  }
  func.func @transform_12(%arg0: i32, %arg1: i32) -> (i32, i32, i32) {
    %c0_i32 = arith.constant 0 : i32
    %c0_i32_0 = arith.constant 0 : i32
    return %arg0, %c0_i32, %arg1 : i32, i32, i32
  }
}

</mosaic_0001>

<llo_original>
// kernel: tpu_custom_call.1
$region0: #{tpu_custom_call.1}
  #allocation0 [shape = 'u32[]', space=smem, size = 0x4, offset = 0x4, fixed_abs, tag = 'smem constant byte address 0x4 - core index']
  #allocation1 [shape = 'u32[144,128]{1,0:T(1,128)}', space=vmem, size = 0x12000, scoped, tag = 'internal scratch']
  #allocation2 [shape = 'f32[256,1]{1,0:T(8,128)}', space=vmem, size = 0x20000, scoped, tag = 'scratch operand']
  %s0 = inlined_call_operand.vmem [shape: f32[2,128,256], index: 0, kind: input, shape index: {}]
  %s1 = inlined_call_operand.hbm [shape: f32[2,128,256], index: 1, kind: input, shape index: {}]
  %s2 = inlined_call_operand.hbm [shape: f32[128,128], index: 2, kind: input, shape index: {}]
  %s3 = inlined_call_operand.vmem [shape: f32[128,1], index: 3, kind: input, shape index: {}]
  %s4 = inlined_call_operand.hbm [shape: f32[128,128], index: 4, kind: input, shape index: {}]
  %s5 = inlined_call_operand.vmem [shape: f32[128,1], index: 5, kind: input, shape index: {}]
  %s6 = inlined_call_operand.vmem [shape: f32[256,128], index: 6, kind: input, shape index: {}]
  %s7 = inlined_call_operand.hbm [shape: f32[256,128], index: 7, kind: input, shape index: {}]
  %s8 = inlined_call_operand.vmem [shape: f32[256,1], index: 8, kind: input, shape index: {}]
  %s9 = inlined_call_operand.hbm [shape: f32[128,256], index: 9, kind: input, shape index: {}]
  %s10 = inlined_call_operand.vmem [shape: f32[128,1], index: 10, kind: input, shape index: {}]
  %s11 = inlined_call_operand.vmem [shape: f32[128,1], index: 11, kind: input, shape index: {}]
  %s12 = inlined_call_operand.hbm [shape: f32[2,1,256], index: 12, kind: output, shape index: {}]
  %s13 = sld [smem:[#allocation0]]
  $region105: #{tpu_custom_call.1} parent=0
    _
  %s15 = ssub.s32 1, %s13
  %s16 = scalar_select 0, %s15, %s13
  $region1: #{tpu_custom_call.1} parent=0
    #allocation3 [shape = 'u8[262144]{0}', space=vmem, size = 0x40000, scoped, tag = 'input window, operand 1']
    #allocation4 [shape = 's32[2]{0}', space=sflag, size = 0x8, scoped, tag = 'scoped memory for tpu_custom_call.1']
    #allocation5 [shape = 's32[2]{0}', space=sflag, size = 0x8, scoped, tag = 'scoped memory for tpu_custom_call.1']
    #allocation6 [shape = 'u8[65536]{0}', space=vmem, size = 0x10000, scoped, tag = 'input window, operand 2, single buffered']
    #allocation7 [shape = 's32[1]{0}', space=sflag, size = 0x4, scoped, tag = 'scoped memory for tpu_custom_call.1']
    #allocation8 [shape = 'u8[65536]{0}', space=vmem, size = 0x10000, scoped, tag = 'input window, operand 4, single buffered']
    #allocation9 [shape = 'u8[131072]{0}', space=vmem, size = 0x20000, scoped, tag = 'input window, operand 7, single buffered']
    #allocation10 [shape = 's32[1]{0}', space=sflag, size = 0x4, scoped, tag = 'scoped memory for tpu_custom_call.1']
    #allocation11 [shape = 'u8[131072]{0}', space=vmem, size = 0x20000, scoped, tag = 'input window, operand 9, single buffered']
    #allocation12 [shape = 'u8[2048]{0}', space=vmem, size = 0x800, scoped, tag = 'output window, operand 0']
    %17 = vsyncpa [#allocation4], 0
    %s18 = scalar_lea.sflag [#allocation4], 1
    %19 = vsyncpa %s18, 0
    %20 = vsyncpa [#allocation7], 0
    %21 = vsyncpa [#allocation10], 0
    %22 = vsyncpa [#allocation5], 0
    %s23 = scalar_lea.sflag [#allocation5], 1
    %24 = vsyncpa %s23, 0
    loop: start=0, step=1, limit=4
    $region2: #{tpu_custom_call.1} parent=1 // loop_pre_header
      _
    $region3: #{tpu_custom_call.1} parent=1 // loop_header
      %s26 = sphi 0, %s30
      %p27 = scmp.ge.s32.totalorder %s26, 4
      %s33 = sphi 0, %s45
      %s34 = sphi 0, %s41
      %s35 = sphi 0, %s33
      %s36 = sphi 0, %s34
      %s37 = sphi 0, %s35
      %s38 = sphi 0, %s36
      %s50 = sphi 0, %s52
      %s53 = sphi 0, %s50
      %s54 = sphi 0, %s53
      %s70 = sphi 0, %s54
      %s76 = sphi 0, %s78
      %s79 = sphi 0, %s76
      %s80 = sphi 0, %s79
      %s96 = sphi 0, %s80
      %s100 = sphi 0, %s100
      %s102 = sphi 0, %s100
      %s103 = sphi 0, %s102
      %s117 = sphi 0, %s103
      %s121 = sphi 0, %s121
      %s123 = sphi 0, %s121
      %s124 = sphi 0, %s123
      %s138 = sphi 0, %s124
      %s142 = sphi 0, %s142
      %s144 = sphi 0, %s142
      %s145 = sphi 0, %s144
      %s159 = sphi 0, %s145
      %s163 = sphi 0, %s163
      %s165 = sphi 0, %s163
      %s166 = sphi 0, %s165
      %s180 = sphi 0, %s166
      %s184 = sphi 0, %s184
      %s186 = sphi 0, %s184
      %s187 = sphi 0, %s186
      %s201 = sphi 0, %s187
      %s205 = sphi 0, %s205
      %s207 = sphi 0, %s205
      %s208 = sphi 0, %s207
      %s222 = sphi 0, %s208
      %s226 = sphi 0, %s226
      %s228 = sphi 0, %s226
      %s229 = sphi 0, %s228
      %s243 = sphi 0, %s229
      %s247 = sphi 0, %s247
      %s249 = sphi 0, %s247
      %s250 = sphi 0, %s249
      %s264 = sphi 0, %s250
      %s268 = sphi 0, %s268
      %s270 = sphi 0, %s268
      %s271 = sphi 0, %s270
      %s285 = sphi 0, %s271
      %s289 = sphi 0, %s289
      %s291 = sphi 0, %s289
      %s292 = sphi 0, %s291
      %s306 = sphi 0, %s292
      %s314 = sphi 0, %s316
      %s317 = sphi 0, %s314
      %s318 = sphi 0, %s317
      %s334 = sphi 0, %s318
    $region4: #{tpu_custom_call.1} parent=1 // loop_header_branch
      %29 = sbr.rel (%p27) target = $region8
    $region5: #{tpu_custom_call.1} parent=1 // loop_body
      %s31 = ssub.s32 %s26, 1
      %s32 = ssub.s32 %s26, 2
      %s39 = sadd.s32 1, %s34
      %p40 = scmp.ge.s32.totalorder %s39, 1
      %s41 = scalar_select %p40, 0, %s39
      %s42 = sadd.s32 1, %s33
      %s43 = scalar_select %p40, %s42, %s33
      %p44 = scmp.ge.s32.totalorder %s43, 2
      %s45 = scalar_select %p44, 0, %s43
      %s46 = ssub.s32 %s33, %s45
      %s47 = ssub.s32 %s34, %s41
      %s48 = sor.u32 %s46, %s47
      %p49 = scmp.eq.s32.totalorder %s48, 0
      %s51 = sadd.s32 %s50, 1
      %s52 = scalar_select %p49, %s50, %s51
      %p55 = pneg %p49
      %p56 = scmp.eq.s32.totalorder %s26, 1
      %p57 = por %p55, %p56
      %p58 = scmp.ne.s32.totalorder %s50, %s53
      %p59 = scmp.eq.s32.totalorder %s26, 0
      %p60 = por %p58, %p59
      %p61 = scmp.ne.s32.totalorder %s50, %s53
      %p62 = scmp.eq.s32.totalorder %s31, 1
      %p63 = por %p61, %p62
      %p64 = scmp.ne.s32.totalorder %s53, %s54
      %p65 = scmp.eq.s32.totalorder %s31, 0
      %p66 = por %p64, %p65
      %p67 = scmp.ne.s32.totalorder %s53, %s54
      %p68 = scmp.eq.s32.totalorder %s32, 1
      %p69 = por %p67, %p68
      %p71 = scmp.ne.s32.totalorder %s54, %s70
      %p72 = scmp.eq.s32.totalorder %s32, 0
      %p73 = por %p71, %p72
      %s74 = ssub.s32 %s33, %s45
      %p75 = scmp.eq.s32.totalorder %s74, 0
      %s77 = sadd.s32 %s76, 1
      %s78 = scalar_select %p75, %s76, %s77
      %p81 = pneg %p75
      %p82 = scmp.eq.s32.totalorder %s26, 1
      %p83 = por %p81, %p82
      %p84 = scmp.ne.s32.totalorder %s76, %s79
      %p85 = scmp.eq.s32.totalorder %s26, 0
      %p86 = por %p84, %p85
      %p87 = scmp.ne.s32.totalorder %s76, %s79
      %p88 = scmp.eq.s32.totalorder %s31, 1
      %p89 = por %p87, %p88
      %p90 = scmp.ne.s32.totalorder %s79, %s80
      %p91 = scmp.eq.s32.totalorder %s31, 0
      %p92 = por %p90, %p91
      %p93 = scmp.ne.s32.totalorder %s79, %s80
      %p94 = scmp.eq.s32.totalorder %s32, 1
      %p95 = por %p93, %p94
      %p97 = scmp.ne.s32.totalorder %s80, %s96
      %p98 = scmp.eq.s32.totalorder %s32, 0
      %p99 = por %p97, %p98
      %s101 = sadd.s32 %s100, 1
      %p104 = scmp.eq.s32.totalorder %s26, 1
      %p105 = scmp.ne.s32.totalorder %s100, %s102
      %p106 = scmp.eq.s32.totalorder %s26, 0
      %p107 = por %p105, %p106
      %p108 = scmp.ne.s32.totalorder %s100, %s102
      %p109 = scmp.eq.s32.totalorder %s31, 1
      %p110 = por %p108, %p109
      %p111 = scmp.ne.s32.totalorder %s102, %s103
      %p112 = scmp.eq.s32.totalorder %s31, 0
      %p113 = por %p111, %p112
      %p114 = scmp.ne.s32.totalorder %s102, %s103
      %p115 = scmp.eq.s32.totalorder %s32, 1
      %p116 = por %p114, %p115
      %p118 = scmp.ne.s32.totalorder %s103, %s117
      %p119 = scmp.eq.s32.totalorder %s32, 0
      %p120 = por %p118, %p119
      %s122 = sadd.s32 %s121, 1
      %p125 = scmp.eq.s32.totalorder %s26, 1
      %p126 = scmp.ne.s32.totalorder %s121, %s123
      %p127 = scmp.eq.s32.totalorder %s26, 0
      %p128 = por %p126, %p127
      %p129 = scmp.ne.s32.totalorder %s121, %s123
      %p130 = scmp.eq.s32.totalorder %s31, 1
      %p131 = por %p129, %p130
      %p132 = scmp.ne.s32.totalorder %s123, %s124
      %p133 = scmp.eq.s32.totalorder %s31, 0
      %p134 = por %p132, %p133
      %p135 = scmp.ne.s32.totalorder %s123, %s124
      %p136 = scmp.eq.s32.totalorder %s32, 1
      %p137 = por %p135, %p136
      %p139 = scmp.ne.s32.totalorder %s124, %s138
      %p140 = scmp.eq.s32.totalorder %s32, 0
      %p141 = por %p139, %p140
      %s143 = sadd.s32 %s142, 1
      %p146 = scmp.eq.s32.totalorder %s26, 1
      %p147 = scmp.ne.s32.totalorder %s142, %s144
      %p148 = scmp.eq.s32.totalorder %s26, 0
      %p149 = por %p147, %p148
      %p150 = scmp.ne.s32.totalorder %s142, %s144
      %p151 = scmp.eq.s32.totalorder %s31, 1
      %p152 = por %p150, %p151
      %p153 = scmp.ne.s32.totalorder %s144, %s145
      %p154 = scmp.eq.s32.totalorder %s31, 0
      %p155 = por %p153, %p154
      %p156 = scmp.ne.s32.totalorder %s144, %s145
      %p157 = scmp.eq.s32.totalorder %s32, 1
      %p158 = por %p156, %p157
      %p160 = scmp.ne.s32.totalorder %s145, %s159
      %p161 = scmp.eq.s32.totalorder %s32, 0
      %p162 = por %p160, %p161
      %s164 = sadd.s32 %s163, 1
      %p167 = scmp.eq.s32.totalorder %s26, 1
      %p168 = scmp.ne.s32.totalorder %s163, %s165
      %p169 = scmp.eq.s32.totalorder %s26, 0
      %p170 = por %p168, %p169
      %p171 = scmp.ne.s32.totalorder %s163, %s165
      %p172 = scmp.eq.s32.totalorder %s31, 1
      %p173 = por %p171, %p172
      %p174 = scmp.ne.s32.totalorder %s165, %s166
      %p175 = scmp.eq.s32.totalorder %s31, 0
      %p176 = por %p174, %p175
      %p177 = scmp.ne.s32.totalorder %s165, %s166
      %p178 = scmp.eq.s32.totalorder %s32, 1
      %p179 = por %p177, %p178
      %p181 = scmp.ne.s32.totalorder %s166, %s180
      %p182 = scmp.eq.s32.totalorder %s32, 0
      %p183 = por %p181, %p182
      %s185 = sadd.s32 %s184, 1
      %p188 = scmp.eq.s32.totalorder %s26, 1
      %p189 = scmp.ne.s32.totalorder %s184, %s186
      %p190 = scmp.eq.s32.totalorder %s26, 0
      %p191 = por %p189, %p190
      %p192 = scmp.ne.s32.totalorder %s184, %s186
      %p193 = scmp.eq.s32.totalorder %s31, 1
      %p194 = por %p192, %p193
      %p195 = scmp.ne.s32.totalorder %s186, %s187
      %p196 = scmp.eq.s32.totalorder %s31, 0
      %p197 = por %p195, %p196
      %p198 = scmp.ne.s32.totalorder %s186, %s187
      %p199 = scmp.eq.s32.totalorder %s32, 1
      %p200 = por %p198, %p199
      %p202 = scmp.ne.s32.totalorder %s187, %s201
      %p203 = scmp.eq.s32.totalorder %s32, 0
      %p204 = por %p202, %p203
      %s206 = sadd.s32 %s205, 1
      %p209 = scmp.eq.s32.totalorder %s26, 1
      %p210 = scmp.ne.s32.totalorder %s205, %s207
      %p211 = scmp.eq.s32.totalorder %s26, 0
      %p212 = por %p210, %p211
      %p213 = scmp.ne.s32.totalorder %s205, %s207
      %p214 = scmp.eq.s32.totalorder %s31, 1
      %p215 = por %p213, %p214
      %p216 = scmp.ne.s32.totalorder %s207, %s208
      %p217 = scmp.eq.s32.totalorder %s31, 0
      %p218 = por %p216, %p217
      %p219 = scmp.ne.s32.totalorder %s207, %s208
      %p220 = scmp.eq.s32.totalorder %s32, 1
      %p221 = por %p219, %p220
      %p223 = scmp.ne.s32.totalorder %s208, %s222
      %p224 = scmp.eq.s32.totalorder %s32, 0
      %p225 = por %p223, %p224
      %s227 = sadd.s32 %s226, 1
      %p230 = scmp.eq.s32.totalorder %s26, 1
      %p231 = scmp.ne.s32.totalorder %s226, %s228
      %p232 = scmp.eq.s32.totalorder %s26, 0
      %p233 = por %p231, %p232
      %p234 = scmp.ne.s32.totalorder %s226, %s228
      %p235 = scmp.eq.s32.totalorder %s31, 1
      %p236 = por %p234, %p235
      %p237 = scmp.ne.s32.totalorder %s228, %s229
      %p238 = scmp.eq.s32.totalorder %s31, 0
      %p239 = por %p237, %p238
      %p240 = scmp.ne.s32.totalorder %s228, %s229
      %p241 = scmp.eq.s32.totalorder %s32, 1
      %p242 = por %p240, %p241
      %p244 = scmp.ne.s32.totalorder %s229, %s243
      %p245 = scmp.eq.s32.totalorder %s32, 0
      %p246 = por %p244, %p245
      %s248 = sadd.s32 %s247, 1
      %p251 = scmp.eq.s32.totalorder %s26, 1
      %p252 = scmp.ne.s32.totalorder %s247, %s249
      %p253 = scmp.eq.s32.totalorder %s26, 0
      %p254 = por %p252, %p253
      %p255 = scmp.ne.s32.totalorder %s247, %s249
      %p256 = scmp.eq.s32.totalorder %s31, 1
      %p257 = por %p255, %p256
      %p258 = scmp.ne.s32.totalorder %s249, %s250
      %p259 = scmp.eq.s32.totalorder %s31, 0
      %p260 = por %p258, %p259
      %p261 = scmp.ne.s32.totalorder %s249, %s250
      %p262 = scmp.eq.s32.totalorder %s32, 1
      %p263 = por %p261, %p262
      %p265 = scmp.ne.s32.totalorder %s250, %s264
      %p266 = scmp.eq.s32.totalorder %s32, 0
      %p267 = por %p265, %p266
      %s269 = sadd.s32 %s268, 1
      %p272 = scmp.eq.s32.totalorder %s26, 1
      %p273 = scmp.ne.s32.totalorder %s268, %s270
      %p274 = scmp.eq.s32.totalorder %s26, 0
      %p275 = por %p273, %p274
      %p276 = scmp.ne.s32.totalorder %s268, %s270
      %p277 = scmp.eq.s32.totalorder %s31, 1
      %p278 = por %p276, %p277
      %p279 = scmp.ne.s32.totalorder %s270, %s271
      %p280 = scmp.eq.s32.totalorder %s31, 0
      %p281 = por %p279, %p280
      %p282 = scmp.ne.s32.totalorder %s270, %s271
      %p283 = scmp.eq.s32.totalorder %s32, 1
      %p284 = por %p282, %p283
      %p286 = scmp.ne.s32.totalorder %s271, %s285
      %p287 = scmp.eq.s32.totalorder %s32, 0
      %p288 = por %p286, %p287
      %s290 = sadd.s32 %s289, 1
      %p293 = scmp.eq.s32.totalorder %s26, 1
      %p294 = scmp.ne.s32.totalorder %s289, %s291
      %p295 = scmp.eq.s32.totalorder %s26, 0
      %p296 = por %p294, %p295
      %p297 = scmp.ne.s32.totalorder %s289, %s291
      %p298 = scmp.eq.s32.totalorder %s31, 1
      %p299 = por %p297, %p298
      %p300 = scmp.ne.s32.totalorder %s291, %s292
      %p301 = scmp.eq.s32.totalorder %s31, 0
      %p302 = por %p300, %p301
      %p303 = scmp.ne.s32.totalorder %s291, %s292
      %p304 = scmp.eq.s32.totalorder %s32, 1
      %p305 = por %p303, %p304
      %p307 = scmp.ne.s32.totalorder %s292, %s306
      %p308 = scmp.eq.s32.totalorder %s32, 0
      %p309 = por %p307, %p308
      %s310 = ssub.s32 %s33, %s45
      %s311 = ssub.s32 %s34, %s41
      %s312 = sor.u32 %s310, %s311
      %p313 = scmp.eq.s32.totalorder %s312, 0
      %s315 = sadd.s32 %s314, 1
      %s316 = scalar_select %p313, %s314, %s315
      %p319 = pneg %p313
      %p320 = scmp.eq.s32.totalorder %s26, 1
      %p321 = por %p319, %p320
      %p322 = scmp.ne.s32.totalorder %s314, %s317
      %p323 = scmp.eq.s32.totalorder %s26, 0
      %p324 = por %p322, %p323
      %p325 = scmp.ne.s32.totalorder %s314, %s317
      %p326 = scmp.eq.s32.totalorder %s31, 1
      %p327 = por %p325, %p326
      %p328 = scmp.ne.s32.totalorder %s317, %s318
      %p329 = scmp.eq.s32.totalorder %s31, 0
      %p330 = por %p328, %p329
      %p331 = scmp.ne.s32.totalorder %s317, %s318
      %p332 = scmp.eq.s32.totalorder %s32, 1
      %p333 = por %p331, %p332
      %p335 = scmp.ne.s32.totalorder %s318, %s334
      %p336 = scmp.eq.s32.totalorder %s32, 0
      %p337 = por %p335, %p336
      %p338 = scmp.le.s32.totalorder 1, %s26
      %p339 = scmp.lt.s32.totalorder %s26, 3
      %p340 = pnand %p338, %p339
      %p341 = pneg %p340
      // Predicated region
      $region9: #{tpu_custom_call.1} parent=5 // pred_check
        _
      $region10: #{tpu_custom_call.1} parent=5 // pred_check_branch
        %343 = sbr.rel (%p340) target = $region12
      $region11: #{tpu_custom_call.1} parent=5 // pred_region
        %s344 = ssub.s32 %s26, 1
        // Predicated region
        $region13: #{tpu_custom_call.1} parent=11 // pred_check
          %p345 = pneg %p113
        $region14: #{tpu_custom_call.1} parent=11 // pred_check_branch
          %347 = sbr.rel (%p345) target = $region16
        $region15: #{tpu_custom_call.1} parent=11 // pred_region
          %s349 = ssub.s32 2048, 2048
          %350 = vsyncadd [#allocation7], %s349
          %s351 = sshll.u32 [#allocation6], 4
          %s352 = int_to_ptr.vmem [resolvable:$true] %s351
          %357 = dma.hbm_to_vmem [thread:$0]  %s2, 2048, %s352, [#allocation7], 128, 128, 8
        $region16: #{tpu_custom_call.1} parent=11 // pred_fallthru
          _
        // Predicated region
        $region17: #{tpu_custom_call.1} parent=11 // pred_check
          %p358 = pneg %p134
        $region18: #{tpu_custom_call.1} parent=11 // pred_check_branch
          %360 = sbr.rel (%p358) target = $region20
        $region19: #{tpu_custom_call.1} parent=11 // pred_region
          _
        $region20: #{tpu_custom_call.1} parent=11 // pred_fallthru
          _
        // Predicated region
        $region21: #{tpu_custom_call.1} parent=11 // pred_check
          %p361 = pneg %p155
        $region22: #{tpu_custom_call.1} parent=11 // pred_check_branch
          %363 = sbr.rel (%p361) target = $region24
        $region23: #{tpu_custom_call.1} parent=11 // pred_region
          %s365 = ssub.s32 2048, 2048
          %366 = vsyncadd [#allocation7], %s365
          %s367 = sshll.u32 [#allocation8], 4
          %s368 = int_to_ptr.vmem [resolvable:$true] %s367
          %373 = dma.hbm_to_vmem [thread:$0]  %s4, 2048, %s368, [#allocation7], 128, 128, 8
        $region24: #{tpu_custom_call.1} parent=11 // pred_fallthru
          _
        // Predicated region
        $region25: #{tpu_custom_call.1} parent=11 // pred_check
          %p374 = pneg %p176
        $region26: #{tpu_custom_call.1} parent=11 // pred_check_branch
          %376 = sbr.rel (%p374) target = $region28
        $region27: #{tpu_custom_call.1} parent=11 // pred_region
          _
        $region28: #{tpu_custom_call.1} parent=11 // pred_fallthru
          _
        // Predicated region
        $region29: #{tpu_custom_call.1} parent=11 // pred_check
          %p377 = pneg %p197
        $region30: #{tpu_custom_call.1} parent=11 // pred_check_branch
          %379 = sbr.rel (%p377) target = $region32
        $region31: #{tpu_custom_call.1} parent=11 // pred_region
          _
        $region32: #{tpu_custom_call.1} parent=11 // pred_fallthru
          _
        // Predicated region
        $region33: #{tpu_custom_call.1} parent=11 // pred_check
          %p380 = pneg %p218
        $region34: #{tpu_custom_call.1} parent=11 // pred_check_branch
          %382 = sbr.rel (%p380) target = $region36
        $region35: #{tpu_custom_call.1} parent=11 // pred_region
          %s384 = ssub.s32 4096, 4096
          %385 = vsyncadd [#allocation10], %s384
          %s386 = sshll.u32 [#allocation9], 4
          %s387 = int_to_ptr.vmem [resolvable:$true] %s386
          %392 = dma.hbm_to_vmem [thread:$0]  %s7, 4096, %s387, [#allocation10], 128, 128, 8
        $region36: #{tpu_custom_call.1} parent=11 // pred_fallthru
          _
        // Predicated region
        $region37: #{tpu_custom_call.1} parent=11 // pred_check
          %p393 = pneg %p239
        $region38: #{tpu_custom_call.1} parent=11 // pred_check_branch
          %395 = sbr.rel (%p393) target = $region40
        $region39: #{tpu_custom_call.1} parent=11 // pred_region
          _
        $region40: #{tpu_custom_call.1} parent=11 // pred_fallthru
          _
        // Predicated region
        $region41: #{tpu_custom_call.1} parent=11 // pred_check
          %p396 = pneg %p260
        $region42: #{tpu_custom_call.1} parent=11 // pred_check_branch
          %398 = sbr.rel (%p396) target = $region44
        $region43: #{tpu_custom_call.1} parent=11 // pred_region
          %s400 = ssub.s32 4096, 4096
          %401 = vsyncadd [#allocation10], %s400
          %s402 = sshll.u32 [#allocation11], 4
          %s403 = int_to_ptr.vmem [resolvable:$true] %s402
          %408 = dma.hbm_to_vmem [thread:$0]  %s9, 4096, %s403, [#allocation10], 256, 256, 16
        $region44: #{tpu_custom_call.1} parent=11 // pred_fallthru
          _
        // Predicated region
        $region45: #{tpu_custom_call.1} parent=11 // pred_check
          %p409 = pneg %p281
        $region46: #{tpu_custom_call.1} parent=11 // pred_check_branch
          %411 = sbr.rel (%p409) target = $region48
        $region47: #{tpu_custom_call.1} parent=11 // pred_region
          _
        $region48: #{tpu_custom_call.1} parent=11 // pred_fallthru
          _
        // Predicated region
        $region49: #{tpu_custom_call.1} parent=11 // pred_check
          %p412 = pneg %p302
        $region50: #{tpu_custom_call.1} parent=11 // pred_check_branch
          %414 = sbr.rel (%p412) target = $region52
        $region51: #{tpu_custom_call.1} parent=11 // pred_region
          _
        $region52: #{tpu_custom_call.1} parent=11 // pred_fallthru
          _
      $region12: #{tpu_custom_call.1} parent=5 // pred_fallthru
        _
      %p415 = scmp.lt.s32.totalorder %s26, 2
      // Predicated region
      $region53: #{tpu_custom_call.1} parent=5 // pred_check
        %p416 = pneg %p415
      $region54: #{tpu_custom_call.1} parent=5 // pred_check_branch
        %418 = sbr.rel (%p416) target = $region56
      $region55: #{tpu_custom_call.1} parent=5 // pred_region
        // Predicated region
        $region57: #{tpu_custom_call.1} parent=55 // pred_check
          %p419 = pneg %p60
        $region58: #{tpu_custom_call.1} parent=55 // pred_check_branch
          %421 = sbr.rel (%p419) target = $region60
        $region59: #{tpu_custom_call.1} parent=55 // pred_region
          %s422 = smul.u32 2, %s34
          %p423 = scmp.lt.s32.totalorder %s33, 1
          %s424 = scalar_select %p423, %s33, 1
          %p425 = scmp.lt.s32.totalorder %s422, 1
          %s426 = scalar_select %p425, %s422, 1
          %s427 = smul.addr %s424, 32
          %s428 = sadd.s32 %s426, %s427
          %s429 = smul.addr %s428, 8
          %s430 = scalar_lea.vmem %s0, %s429
          %s431 = smul.u32 2, %s34
        $region60: #{tpu_custom_call.1} parent=55 // pred_fallthru
          _
        // Predicated region
        $region61: #{tpu_custom_call.1} parent=55 // pred_check
          %p432 = pneg %p86
        $region62: #{tpu_custom_call.1} parent=55 // pred_check_branch
          %434 = sbr.rel (%p432) target = $region64
        $region63: #{tpu_custom_call.1} parent=55 // pred_region
          %s435 = sand.u32 %s76, 1
          %s436 = scalar_lea.sflag [#allocation4], %s435
          %s437 = sand.u32 %s76, 1
          %s438 = smul.addr %s437, 256
          %s439 = scalar_lea.vmem [#allocation3], %s438
          %s441 = ssub.s32 4096, 4096
          %442 = vsyncadd %s436, %s441
          %s443 = smul.addr %s33, 32
          %s444 = smul.addr %s443, 128
          %s445 = scalar_lea.hbm %s1, %s444
          %s446 = sshll.u32 %s439, 4
          %s447 = int_to_ptr.vmem [resolvable:$true] %s446
          %452 = dma.hbm_to_vmem [thread:$0]  %s445, 4096, %s447, %s436, 256, 256, 16
        $region64: #{tpu_custom_call.1} parent=55 // pred_fallthru
          _
      $region56: #{tpu_custom_call.1} parent=5 // pred_fallthru
        _
      %p453 = scmp.le.s32.totalorder 1, %s26
      %p454 = scmp.lt.s32.totalorder %s26, 3
      %p455 = pnand %p453, %p454
      %p456 = pneg %p455
      // Predicated region
      $region65: #{tpu_custom_call.1} parent=5 // pred_check
        _
      $region66: #{tpu_custom_call.1} parent=5 // pred_check_branch
        %458 = sbr.rel (%p455) target = $region68
      $region67: #{tpu_custom_call.1} parent=5 // pred_region
        %s459 = ssub.s32 %s26, 1
        %s460 = sand.u32 %s79, 1
        %s461 = scalar_lea.sflag [#allocation4], %s460
        %s462 = sand.u32 %s79, 1
        %s463 = smul.addr %s462, 256
        %s464 = scalar_lea.vmem [#allocation3], %s463
        // Predicated region
        $region69: #{tpu_custom_call.1} parent=67 // pred_check
          %p465 = pneg %p92
        $region70: #{tpu_custom_call.1} parent=67 // pred_check_branch
          %467 = sbr.rel (%p465) target = $region72
        $region71: #{tpu_custom_call.1} parent=67 // pred_region
          %468 = dma.done %s461, 4096
        $region72: #{tpu_custom_call.1} parent=67 // pred_fallthru
          _
        // Predicated region
        $region73: #{tpu_custom_call.1} parent=67 // pred_check
          %p469 = pneg %p113
        $region74: #{tpu_custom_call.1} parent=67 // pred_check_branch
          %471 = sbr.rel (%p469) target = $region76
        $region75: #{tpu_custom_call.1} parent=67 // pred_region
          %472 = dma.done [#allocation7], 2048
        $region76: #{tpu_custom_call.1} parent=67 // pred_fallthru
          _
        // Predicated region
        $region77: #{tpu_custom_call.1} parent=67 // pred_check
          %p473 = pneg %p155
        $region78: #{tpu_custom_call.1} parent=67 // pred_check_branch
          %475 = sbr.rel (%p473) target = $region80
        $region79: #{tpu_custom_call.1} parent=67 // pred_region
          %476 = dma.done [#allocation7], 2048
        $region80: #{tpu_custom_call.1} parent=67 // pred_fallthru
          _
        // Predicated region
        $region81: #{tpu_custom_call.1} parent=67 // pred_check
          %p477 = pneg %p218
        $region82: #{tpu_custom_call.1} parent=67 // pred_check_branch
          %479 = sbr.rel (%p477) target = $region84
        $region83: #{tpu_custom_call.1} parent=67 // pred_region
          %480 = dma.done [#allocation10], 4096
        $region84: #{tpu_custom_call.1} parent=67 // pred_fallthru
          _
        // Predicated region
        $region85: #{tpu_custom_call.1} parent=67 // pred_check
          %p481 = pneg %p260
        $region86: #{tpu_custom_call.1} parent=67 // pred_check_branch
          %483 = sbr.rel (%p481) target = $region88
        $region87: #{tpu_custom_call.1} parent=67 // pred_region
          %484 = dma.done [#allocation10], 4096
        $region88: #{tpu_custom_call.1} parent=67 // pred_fallthru
          _
        %s485 = smul.u32 2, %s36
        %p486 = scmp.lt.s32.totalorder %s35, 1
        %s487 = scalar_select %p486, %s35, 1
        %p488 = scmp.lt.s32.totalorder %s485, 1
        %s489 = scalar_select %p488, %s485, 1
        %s490 = smul.addr %s487, 32
        %s491 = sadd.s32 %s489, %s490
        %s492 = smul.addr %s491, 8
        %s493 = scalar_lea.vmem %s0, %s492
        %p494 = pneg %p66
        %p495 = pneg %p63
        %s496 = sand.u32 %s79, 1
        %s497 = scalar_lea.sflag [#allocation4], %s496
        %s498 = sand.u32 %s79, 1
        %s499 = smul.addr %s498, 256
        %s500 = scalar_lea.vmem [#allocation3], %s499
        %p501 = pneg %p92
        %p502 = pneg %p89
        %p503 = pneg %p113
        %p504 = pneg %p110
        %p505 = pneg %p134
        %p506 = pneg %p131
        %p507 = pneg %p155
        %p508 = pneg %p152
        %p509 = pneg %p176
        %p510 = pneg %p173
        %p511 = pneg %p197
        %p512 = pneg %p194
        %p513 = pneg %p218
        %p514 = pneg %p215
        %p515 = pneg %p239
        %p516 = pneg %p236
        %p517 = pneg %p260
        %p518 = pneg %p257
        %p519 = pneg %p281
        %p520 = pneg %p278
        %p521 = pneg %p302
        %p522 = pneg %p299
        %p523 = pneg %p330
        %p524 = pneg %p327
        %s525 = sand.u32 %s317, 1
        %s526 = scalar_lea.sflag [#allocation5], %s525
        %s527 = sand.u32 %s317, 1
        %s528 = smul.addr %s527, 2
        %s529 = scalar_lea.vmem [#allocation12], %s528
        %s530 = smul.u32 2, %s36
        %p531 = scmp.lt.s32.totalorder %s35, 1
        %s532 = scalar_select %p531, %s35, 1
        %p533 = scmp.lt.s32.totalorder %s530, 1
        %s534 = scalar_select %p533, %s530, 1
        %s535 = smul.addr %s532, 32
        %s536 = sadd.s32 %s534, %s535
        %s537 = smul.addr %s536, 8
        %s538 = scalar_lea.vmem %s0, %s537
        %s539 = smul.u32 2, %s36
        %s540 = smul.u32 2, %s36
        %p541 = scmp.eq.s32.totalorder %s36, 0
        // Predicated region
        $region89: #{tpu_custom_call.1} parent=67 // pred_check
          %p542 = pneg %p541
        $region90: #{tpu_custom_call.1} parent=67 // pred_check_branch
          %544 = sbr.rel (%p542) target = $region92
        $region91: #{tpu_custom_call.1} parent=67 // pred_region
          %v545 = vld [vmem:[%s464] sm:$0xff]
          %v546 = vld [vmem:[%s464 + $0x8] sm:$0xff]
          %v547 = vld [vmem:[%s464 + $0x10] sm:$0xff]
          %v548 = vld [vmem:[%s464 + $0x18] sm:$0xff]
          %v549 = vld [vmem:[%s464 + $0x20] sm:$0xff]
          %v550 = vld [vmem:[%s464 + $0x28] sm:$0xff]
          %v551 = vld [vmem:[%s464 + $0x30] sm:$0xff]
          %v552 = vld [vmem:[%s464 + $0x38] sm:$0xff]
          %v553 = vld [vmem:[%s464 + $0x40] sm:$0xff]
          %v554 = vld [vmem:[%s464 + $0x48] sm:$0xff]
          %v555 = vld [vmem:[%s464 + $0x50] sm:$0xff]
          %v556 = vld [vmem:[%s464 + $0x58] sm:$0xff]
          %v557 = vld [vmem:[%s464 + $0x60] sm:$0xff]
          %v558 = vld [vmem:[%s464 + $0x68] sm:$0xff]
          %v559 = vld [vmem:[%s464 + $0x70] sm:$0xff]
          %v560 = vld [vmem:[%s464 + $0x78] sm:$0xff]
          %v561 = vld [vmem:[%s464 + $0x80] sm:$0xff]
          %v562 = vld [vmem:[%s464 + $0x88] sm:$0xff]
          %v563 = vld [vmem:[%s464 + $0x90] sm:$0xff]
          %v564 = vld [vmem:[%s464 + $0x98] sm:$0xff]
          %v565 = vld [vmem:[%s464 + $0xa0] sm:$0xff]
          %v566 = vld [vmem:[%s464 + $0xa8] sm:$0xff]
          %v567 = vld [vmem:[%s464 + $0xb0] sm:$0xff]
          %v568 = vld [vmem:[%s464 + $0xb8] sm:$0xff]
          %v569 = vld [vmem:[%s464 + $0xc0] sm:$0xff]
          %v570 = vld [vmem:[%s464 + $0xc8] sm:$0xff]
          %v571 = vld [vmem:[%s464 + $0xd0] sm:$0xff]
          %v572 = vld [vmem:[%s464 + $0xd8] sm:$0xff]
          %v573 = vld [vmem:[%s464 + $0xe0] sm:$0xff]
          %v574 = vld [vmem:[%s464 + $0xe8] sm:$0xff]
          %v575 = vld [vmem:[%s464 + $0xf0] sm:$0xff]
          %v576 = vld [vmem:[%s464 + $0xf8] sm:$0xff]
          %v577 = vld [vmem:[#allocation6] sm:$0xff]
          %v578 = vld [vmem:[#allocation6 + $0x8] sm:$0xff]
          %v579 = vld [vmem:[#allocation6 + $0x10] sm:$0xff]
          %v580 = vld [vmem:[#allocation6 + $0x18] sm:$0xff]
          %v581 = vld [vmem:[#allocation6 + $0x20] sm:$0xff]
          %v582 = vld [vmem:[#allocation6 + $0x28] sm:$0xff]
          %v583 = vld [vmem:[#allocation6 + $0x30] sm:$0xff]
          %v584 = vld [vmem:[#allocation6 + $0x38] sm:$0xff]
          %v585 = vld [vmem:[#allocation6 + $0x40] sm:$0xff]
          %v586 = vld [vmem:[#allocation6 + $0x48] sm:$0xff]
          %v587 = vld [vmem:[#allocation6 + $0x50] sm:$0xff]
          %v588 = vld [vmem:[#allocation6 + $0x58] sm:$0xff]
          %v589 = vld [vmem:[#allocation6 + $0x60] sm:$0xff]
          %v590 = vld [vmem:[#allocation6 + $0x68] sm:$0xff]
          %v591 = vld [vmem:[#allocation6 + $0x70] sm:$0xff]
          %v592 = vld [vmem:[#allocation6 + $0x78] sm:$0xff]
          %v593 = vld [vmem:[%s3] sm:$0xff]
          %v594 = vld [vmem:[%s3 + $0x8] sm:$0xff]
          %v595 = vld [vmem:[%s3 + $0x10] sm:$0xff]
          %v596 = vld [vmem:[%s3 + $0x18] sm:$0xff]
          %v597 = vld [vmem:[%s3 + $0x20] sm:$0xff]
          %v598 = vld [vmem:[%s3 + $0x28] sm:$0xff]
          %v599 = vld [vmem:[%s3 + $0x30] sm:$0xff]
          %v600 = vld [vmem:[%s3 + $0x38] sm:$0xff]
          %v601 = vld [vmem:[%s3 + $0x40] sm:$0xff]
          %v602 = vld [vmem:[%s3 + $0x48] sm:$0xff]
          %v603 = vld [vmem:[%s3 + $0x50] sm:$0xff]
          %v604 = vld [vmem:[%s3 + $0x58] sm:$0xff]
          %v605 = vld [vmem:[%s3 + $0x60] sm:$0xff]
          %v606 = vld [vmem:[%s3 + $0x68] sm:$0xff]
          %v607 = vld [vmem:[%s3 + $0x70] sm:$0xff]
          %v608 = vld [vmem:[%s3 + $0x78] sm:$0xff]
          %610 = vset.pattern.permute.xlu0 0
          %611 = vperm.xlu0 %610, %v593
          %v612 = vpop.permute.xlu0 %611
          %615 = vset.pattern.permute.xlu0 0
          %616 = vperm.xlu0 %615, %v594
          %v617 = vpop.permute.xlu0 %616
          %620 = vset.pattern.permute.xlu0 0
          %621 = vperm.xlu0 %620, %v595
          %v622 = vpop.permute.xlu0 %621
          %625 = vset.pattern.permute.xlu0 0
          %626 = vperm.xlu0 %625, %v596
          %v627 = vpop.permute.xlu0 %626
          %630 = vset.pattern.permute.xlu0 0
          %631 = vperm.xlu0 %630, %v597
          %v632 = vpop.permute.xlu0 %631
          %635 = vset.pattern.permute.xlu0 0
          %636 = vperm.xlu0 %635, %v598
          %v637 = vpop.permute.xlu0 %636
          %640 = vset.pattern.permute.xlu0 0
          %641 = vperm.xlu0 %640, %v599
          %v642 = vpop.permute.xlu0 %641
          %645 = vset.pattern.permute.xlu0 0
          %646 = vperm.xlu0 %645, %v600
          %v647 = vpop.permute.xlu0 %646
          %650 = vset.pattern.permute.xlu0 0
          %651 = vperm.xlu0 %650, %v601
          %v652 = vpop.permute.xlu0 %651
          %655 = vset.pattern.permute.xlu0 0
          %656 = vperm.xlu0 %655, %v602
          %v657 = vpop.permute.xlu0 %656
          %660 = vset.pattern.permute.xlu0 0
          %661 = vperm.xlu0 %660, %v603
          %v662 = vpop.permute.xlu0 %661
          %665 = vset.pattern.permute.xlu0 0
          %666 = vperm.xlu0 %665, %v604
          %v667 = vpop.permute.xlu0 %666
          %670 = vset.pattern.permute.xlu0 0
          %671 = vperm.xlu0 %670, %v605
          %v672 = vpop.permute.xlu0 %671
          %675 = vset.pattern.permute.xlu0 0
          %676 = vperm.xlu0 %675, %v606
          %v677 = vpop.permute.xlu0 %676
          %680 = vset.pattern.permute.xlu0 0
          %681 = vperm.xlu0 %680, %v607
          %v682 = vpop.permute.xlu0 %681
          %685 = vset.pattern.permute.xlu0 0
          %686 = vperm.xlu0 %685, %v608
          %v687 = vpop.permute.xlu0 %686
          %689 = vmatprep.subr.mxu0 %v546
          %690 = vmatpush1.msra.mxu0 %v545
          %691 = vmatprep.subr.mxu0 %v548
          %692 = vmatpush1.msra.mxu0 %v547
          %693 = vmatprep.subr.mxu0 %v550
          %694 = vmatpush1.msra.mxu0 %v549
          %695 = vmatprep.subr.mxu0 %v552
          %696 = vmatpush1.msra.mxu0 %v551
          %697 = vmatprep.subr.mxu0 %v554
          %698 = vmatpush1.msra.mxu0 %v553
          %699 = vmatprep.subr.mxu0 %v556
          %700 = vmatpush1.msra.mxu0 %v555
          %701 = vmatprep.subr.mxu0 %v558
          %702 = vmatpush1.msra.mxu0 %v557
          %703 = vmatprep.subr.mxu0 %v560
          %704 = vmatpush1.msra.mxu0 %v559
          %705 = vmatprep.subr.mxu0 %v562
          %706 = vmatpush1.msra.mxu0 %v561
          %707 = vmatprep.subr.mxu0 %v564
          %708 = vmatpush1.msra.mxu0 %v563
          %709 = vmatprep.subr.mxu0 %v566
          %710 = vmatpush1.msra.mxu0 %v565
          %711 = vmatprep.subr.mxu0 %v568
          %712 = vmatpush1.msra.mxu0 %v567
          %713 = vmatprep.subr.mxu0 %v570
          %714 = vmatpush1.msra.mxu0 %v569
          %715 = vmatprep.subr.mxu0 %v572
          %716 = vmatpush1.msra.mxu0 %v571
          %717 = vmatprep.subr.mxu0 %v574
          %718 = vmatpush1.msra.mxu0 %v573
          %719 = vmatprep.subr.mxu0 %v576
          %720 = vmatpush1.msra.mxu0 %v575
          %721 = vmatprep.subr.mxu0 0.0
          %722 = vmatpush1.msra.mxu0 0.0
          %723 = vmatprep.subr.mxu0 0.0
          %724 = vmatpush1.msra.mxu0 0.0
          %725 = vmatprep.subr.mxu0 0.0
          %726 = vmatpush1.msra.mxu0 0.0
          %727 = vmatprep.subr.mxu0 0.0
          %728 = vmatpush1.msra.mxu0 0.0
          %729 = vmatprep.subr.mxu0 0.0
          %730 = vmatpush1.msra.mxu0 0.0
          %731 = vmatprep.subr.mxu0 0.0
          %732 = vmatpush1.msra.mxu0 0.0
          %733 = vmatprep.subr.mxu0 0.0
          %734 = vmatpush1.msra.mxu0 0.0
          %735 = vmatprep.subr.mxu0 0.0
          %736 = vmatpush1.msra.mxu0 0.0
          %737 = vmatprep.subr.mxu0 0.0
          %738 = vmatpush1.msra.mxu0 0.0
          %739 = vmatprep.subr.mxu0 0.0
          %740 = vmatpush1.msra.mxu0 0.0
          %741 = vmatprep.subr.mxu0 0.0
          %742 = vmatpush1.msra.mxu0 0.0
          %743 = vmatprep.subr.mxu0 0.0
          %744 = vmatpush1.msra.mxu0 0.0
          %745 = vmatprep.subr.mxu0 0.0
          %746 = vmatpush1.msra.mxu0 0.0
          %747 = vmatprep.subr.mxu0 0.0
          %748 = vmatpush1.msra.mxu0 0.0
          %749 = vmatprep.subr.mxu0 0.0
          %750 = vmatpush1.msra.mxu0 0.0
          %751 = vmatprep.subr.mxu0 0.0
          %752 = vmatpush1.msra.mxu0 0.0
          %753 = vmatprep.mubr.f32.mxu0 0.0
          %754 = vmatmul.mubr.f32.gmra.mrb[0].mxu0 %v577
          %v755 = vpop.f32.mrb[0].mxu0
          %v756 = vadd.f32 %v612, %v755
          %v757 = vpop.f32.mrb[0].mxu0
          %v758 = vadd.f32 %v612, %v757
          %759 = vmatprep.mubr.f32.mxu0 0.0
          %760 = vmatmul.mubr.f32.gmra.mrb[0].mxu0 %v578
          %v761 = vpop.f32.mrb[0].mxu0
          %v762 = vadd.f32 %v617, %v761
          %v763 = vpop.f32.mrb[0].mxu0
          %v764 = vadd.f32 %v617, %v763
          %765 = vmatprep.mubr.f32.mxu0 0.0
          %766 = vmatmul.mubr.f32.gmra.mrb[0].mxu0 %v579
          %v767 = vpop.f32.mrb[0].mxu0
          %v768 = vadd.f32 %v622, %v767
          %v769 = vpop.f32.mrb[0].mxu0
          %v770 = vadd.f32 %v622, %v769
          %771 = vmatprep.mubr.f32.mxu0 0.0
          %772 = vmatmul.mubr.f32.gmra.mrb[0].mxu0 %v580
          %v773 = vpop.f32.mrb[0].mxu0
          %v774 = vadd.f32 %v627, %v773
          %v775 = vpop.f32.mrb[0].mxu0
          %v776 = vadd.f32 %v627, %v775
          %777 = vmatprep.mubr.f32.mxu0 0.0
          %778 = vmatmul.mubr.f32.gmra.mrb[0].mxu0 %v581
          %v779 = vpop.f32.mrb[0].mxu0
          %v780 = vadd.f32 %v632, %v779
          %v781 = vpop.f32.mrb[0].mxu0
          %v782 = vadd.f32 %v632, %v781
          %783 = vmatprep.mubr.f32.mxu0 0.0
          %784 = vmatmul.mubr.f32.gmra.mrb[0].mxu0 %v582
          %v785 = vpop.f32.mrb[0].mxu0
          %v786 = vadd.f32 %v637, %v785
          %v787 = vpop.f32.mrb[0].mxu0
          %v788 = vadd.f32 %v637, %v787
          %789 = vmatprep.mubr.f32.mxu0 0.0
          %790 = vmatmul.mubr.f32.gmra.mrb[0].mxu0 %v583
          %v791 = vpop.f32.mrb[0].mxu0
          %v792 = vadd.f32 %v642, %v791
          %v793 = vpop.f32.mrb[0].mxu0
          %v794 = vadd.f32 %v642, %v793
          %795 = vmatprep.mubr.f32.mxu0 0.0
          %796 = vmatmul.mubr.f32.gmra.mrb[0].mxu0 %v584
          %v797 = vpop.f32.mrb[0].mxu0
          %v798 = vadd.f32 %v647, %v797
          %v799 = vpop.f32.mrb[0].mxu0
          %v800 = vadd.f32 %v647, %v799
          %801 = vmatprep.mubr.f32.mxu0 0.0
          %802 = vmatmul.mubr.f32.gmra.mrb[0].mxu0 %v585
          %v803 = vpop.f32.mrb[0].mxu0
          %v804 = vadd.f32 %v652, %v803
          %v805 = vpop.f32.mrb[0].mxu0
          %v806 = vadd.f32 %v652, %v805
          %807 = vmatprep.mubr.f32.mxu0 0.0
          %808 = vmatmul.mubr.f32.gmra.mrb[0].mxu0 %v586
          %v809 = vpop.f32.mrb[0].mxu0
          %v810 = vadd.f32 %v657, %v809
          %v811 = vpop.f32.mrb[0].mxu0
          %v812 = vadd.f32 %v657, %v811
          %813 = vmatprep.mubr.f32.mxu0 0.0
          %814 = vmatmul.mubr.f32.gmra.mrb[0].mxu0 %v587
          %v815 = vpop.f32.mrb[0].mxu0
          %v816 = vadd.f32 %v662, %v815
          %v817 = vpop.f32.mrb[0].mxu0
          %v818 = vadd.f32 %v662, %v817
          %819 = vmatprep.mubr.f32.mxu0 0.0
          %820 = vmatmul.mubr.f32.gmra.mrb[0].mxu0 %v588
          %v821 = vpop.f32.mrb[0].mxu0
          %v822 = vadd.f32 %v667, %v821
          %v823 = vpop.f32.mrb[0].mxu0
          %v824 = vadd.f32 %v667, %v823
          %825 = vmatprep.mubr.f32.mxu0 0.0
          %826 = vmatmul.mubr.f32.gmra.mrb[0].mxu0 %v589
          %v827 = vpop.f32.mrb[0].mxu0
          %v828 = vadd.f32 %v672, %v827
          %v829 = vpop.f32.mrb[0].mxu0
          %v830 = vadd.f32 %v672, %v829
          %831 = vmatprep.mubr.f32.mxu0 0.0
          %832 = vmatmul.mubr.f32.gmra.mrb[0].mxu0 %v590
          %v833 = vpop.f32.mrb[0].mxu0
          %v834 = vadd.f32 %v677, %v833
          %v835 = vpop.f32.mrb[0].mxu0
          %v836 = vadd.f32 %v677, %v835
          %837 = vmatprep.mubr.f32.mxu0 0.0
          %838 = vmatmul.mubr.f32.gmra.mrb[0].mxu0 %v591
          %v839 = vpop.f32.mrb[0].mxu0
          %v840 = vadd.f32 %v682, %v839
          %v841 = vpop.f32.mrb[0].mxu0
          %v842 = vadd.f32 %v682, %v841
          %843 = vmatprep.mubr.f32.mxu0 0.0
          %844 = vmatmul.mubr.f32.gmra.mrb[0].mxu0 %v592
          %v845 = vpop.f32.mrb[0].mxu0
          %v846 = vadd.f32 %v687, %v845
          %v847 = vpop.f32.mrb[0].mxu0
          %v848 = vadd.f32 %v687, %v847
          %849 = vdwg.mxu0
          %v850 = vmax.f32 %v756, 0.0
          %v851 = vmax.f32 %v758, 0.0
          %v852 = vmax.f32 %v762, 0.0
          %v853 = vmax.f32 %v764, 0.0
          %v854 = vmax.f32 %v768, 0.0
          %v855 = vmax.f32 %v770, 0.0
          %v856 = vmax.f32 %v774, 0.0
          %v857 = vmax.f32 %v776, 0.0
          %v858 = vmax.f32 %v780, 0.0
          %v859 = vmax.f32 %v782, 0.0
          %v860 = vmax.f32 %v786, 0.0
          %v861 = vmax.f32 %v788, 0.0
          %v862 = vmax.f32 %v792, 0.0
          %v863 = vmax.f32 %v794, 0.0
          %v864 = vmax.f32 %v798, 0.0
          %v865 = vmax.f32 %v800, 0.0
          %v866 = vmax.f32 %v804, 0.0
          %v867 = vmax.f32 %v806, 0.0
          %v868 = vmax.f32 %v810, 0.0
          %v869 = vmax.f32 %v812, 0.0
          %v870 = vmax.f32 %v816, 0.0
          %v871 = vmax.f32 %v818, 0.0
          %v872 = vmax.f32 %v822, 0.0
          %v873 = vmax.f32 %v824, 0.0
          %v874 = vmax.f32 %v828, 0.0
          %v875 = vmax.f32 %v830, 0.0
          %v876 = vmax.f32 %v834, 0.0
          %v877 = vmax.f32 %v836, 0.0
          %v878 = vmax.f32 %v840, 0.0
          %v879 = vmax.f32 %v842, 0.0
          %v880 = vmax.f32 %v846, 0.0
          %v881 = vmax.f32 %v848, 0.0
          %v882 = vld [vmem:[#allocation8] sm:$0xff]
          %v883 = vld [vmem:[#allocation8 + $0x8] sm:$0xff]
          %v884 = vld [vmem:[#allocation8 + $0x10] sm:$0xff]
          %v885 = vld [vmem:[#allocation8 + $0x18] sm:$0xff]
          %v886 = vld [vmem:[#allocation8 + $0x20] sm:$0xff]
          %v887 = vld [vmem:[#allocation8 + $0x28] sm:$0xff]
          %v888 = vld [vmem:[#allocation8 + $0x30] sm:$0xff]
          %v889 = vld [vmem:[#allocation8 + $0x38] sm:$0xff]
          %v890 = vld [vmem:[#allocation8 + $0x40] sm:$0xff]
          %v891 = vld [vmem:[#allocation8 + $0x48] sm:$0xff]
          %v892 = vld [vmem:[#allocation8 + $0x50] sm:$0xff]
          %v893 = vld [vmem:[#allocation8 + $0x58] sm:$0xff]
          %v894 = vld [vmem:[#allocation8 + $0x60] sm:$0xff]
          %v895 = vld [vmem:[#allocation8 + $0x68] sm:$0xff]
          %v896 = vld [vmem:[#allocation8 + $0x70] sm:$0xff]
          %v897 = vld [vmem:[#allocation8 + $0x78] sm:$0xff]
          %v898 = vld [vmem:[%s5] sm:$0xff]
          %v899 = vld [vmem:[%s5 + $0x8] sm:$0xff]
          %v900 = vld [vmem:[%s5 + $0x10] sm:$0xff]
          %v901 = vld [vmem:[%s5 + $0x18] sm:$0xff]
          %v902 = vld [vmem:[%s5 + $0x20] sm:$0xff]
          %v903 = vld [vmem:[%s5 + $0x28] sm:$0xff]
          %v904 = vld [vmem:[%s5 + $0x30] sm:$0xff]
          %v905 = vld [vmem:[%s5 + $0x38] sm:$0xff]
          %v906 = vld [vmem:[%s5 + $0x40] sm:$0xff]
          %v907 = vld [vmem:[%s5 + $0x48] sm:$0xff]
          %v908 = vld [vmem:[%s5 + $0x50] sm:$0xff]
          %v909 = vld [vmem:[%s5 + $0x58] sm:$0xff]
          %v910 = vld [vmem:[%s5 + $0x60] sm:$0xff]
          %v911 = vld [vmem:[%s5 + $0x68] sm:$0xff]
          %v912 = vld [vmem:[%s5 + $0x70] sm:$0xff]
          %v913 = vld [vmem:[%s5 + $0x78] sm:$0xff]
          %915 = vset.pattern.permute.xlu0 0
          %916 = vperm.xlu0 %915, %v898
          %v917 = vpop.permute.xlu0 %916
          %920 = vset.pattern.permute.xlu0 0
          %921 = vperm.xlu0 %920, %v899
          %v922 = vpop.permute.xlu0 %921
          %925 = vset.pattern.permute.xlu0 0
          %926 = vperm.xlu0 %925, %v900
          %v927 = vpop.permute.xlu0 %926
          %930 = vset.pattern.permute.xlu0 0
          %931 = vperm.xlu0 %930, %v901
          %v932 = vpop.permute.xlu0 %931
          %935 = vset.pattern.permute.xlu0 0
          %936 = vperm.xlu0 %935, %v902
          %v937 = vpop.permute.xlu0 %936
          %940 = vset.pattern.permute.xlu0 0
          %941 = vperm.xlu0 %940, %v903
          %v942 = vpop.permute.xlu0 %941
          %945 = vset.pattern.permute.xlu0 0
          %946 = vperm.xlu0 %945, %v904
          %v947 = vpop.permute.xlu0 %946
          %950 = vset.pattern.permute.xlu0 0
          %951 = vperm.xlu0 %950, %v905
          %v952 = vpop.permute.xlu0 %951
          %955 = vset.pattern.permute.xlu0 0
          %956 = vperm.xlu0 %955, %v906
          %v957 = vpop.permute.xlu0 %956
          %960 = vset.pattern.permute.xlu0 0
          %961 = vperm.xlu0 %960, %v907
          %v962 = vpop.permute.xlu0 %961
          %965 = vset.pattern.permute.xlu0 0
          %966 = vperm.xlu0 %965, %v908
          %v967 = vpop.permute.xlu0 %966
          %970 = vset.pattern.permute.xlu0 0
          %971 = vperm.xlu0 %970, %v909
          %v972 = vpop.permute.xlu0 %971
          %975 = vset.pattern.permute.xlu0 0
          %976 = vperm.xlu0 %975, %v910
          %v977 = vpop.permute.xlu0 %976
          %980 = vset.pattern.permute.xlu0 0
          %981 = vperm.xlu0 %980, %v911
          %v982 = vpop.permute.xlu0 %981
          %985 = vset.pattern.permute.xlu0 0
          %986 = vperm.xlu0 %985, %v912
          %v987 = vpop.permute.xlu0 %986
          %990 = vset.pattern.permute.xlu0 0
          %991 = vperm.xlu0 %990, %v913
          %v992 = vpop.permute.xlu0 %991
          %994 = vmatprep.subr.mxu0 %v851
          %995 = vmatpush1.msra.mxu0 %v850
          %996 = vmatprep.subr.mxu0 %v853
          %997 = vmatpush1.msra.mxu0 %v852
          %998 = vmatprep.subr.mxu0 %v855
          %999 = vmatpush1.msra.mxu0 %v854
          %1000 = vmatprep.subr.mxu0 %v857
          %1001 = vmatpush1.msra.mxu0 %v856
          %1002 = vmatprep.subr.mxu0 %v859
          %1003 = vmatpush1.msra.mxu0 %v858
          %1004 = vmatprep.subr.mxu0 %v861
          %1005 = vmatpush1.msra.mxu0 %v860
          %1006 = vmatprep.subr.mxu0 %v863
          %1007 = vmatpush1.msra.mxu0 %v862
          %1008 = vmatprep.subr.mxu0 %v865
          %1009 = vmatpush1.msra.mxu0 %v864
          %1010 = vmatprep.subr.mxu0 %v867
          %1011 = vmatpush1.msra.mxu0 %v866
          %1012 = vmatprep.subr.mxu0 %v869
          %1013 = vmatpush1.msra.mxu0 %v868
          %1014 = vmatprep.subr.mxu0 %v871
          %1015 = vmatpush1.msra.mxu0 %v870
          %1016 = vmatprep.subr.mxu0 %v873
          %1017 = vmatpush1.msra.mxu0 %v872
          %1018 = vmatprep.subr.mxu0 %v875
          %1019 = vmatpush1.msra.mxu0 %v874
          %1020 = vmatprep.subr.mxu0 %v877
          %1021 = vmatpush1.msra.mxu0 %v876
          %1022 = vmatprep.subr.mxu0 %v879
          %1023 = vmatpush1.msra.mxu0 %v878
          %1024 = vmatprep.subr.mxu0 %v881
          %1025 = vmatpush1.msra.mxu0 %v880
          %1026 = vmatprep.subr.mxu0 0.0
          %1027 = vmatpush1.msra.mxu0 0.0
          %1028 = vmatprep.subr.mxu0 0.0
          %1029 = vmatpush1.msra.mxu0 0.0
          %1030 = vmatprep.subr.mxu0 0.0
          %1031 = vmatpush1.msra.mxu0 0.0
          %1032 = vmatprep.subr.mxu0 0.0
          %1033 = vmatpush1.msra.mxu0 0.0
          %1034 = vmatprep.subr.mxu0 0.0
          %1035 = vmatpush1.msra.mxu0 0.0
          %1036 = vmatprep.subr.mxu0 0.0
          %1037 = vmatpush1.msra.mxu0 0.0
          %1038 = vmatprep.subr.mxu0 0.0
          %1039 = vmatpush1.msra.mxu0 0.0
          %1040 = vmatprep.subr.mxu0 0.0
          %1041 = vmatpush1.msra.mxu0 0.0
          %1042 = vmatprep.subr.mxu0 0.0
          %1043 = vmatpush1.msra.mxu0 0.0
          %1044 = vmatprep.subr.mxu0 0.0
          %1045 = vmatpush1.msra.mxu0 0.0
          %1046 = vmatprep.subr.mxu0 0.0
          %1047 = vmatpush1.msra.mxu0 0.0
          %1048 = vmatprep.subr.mxu0 0.0
          %1049 = vmatpush1.msra.mxu0 0.0
          %1050 = vmatprep.subr.mxu0 0.0
          %1051 = vmatpush1.msra.mxu0 0.0
          %1052 = vmatprep.subr.mxu0 0.0
          %1053 = vmatpush1.msra.mxu0 0.0
          %1054 = vmatprep.subr.mxu0 0.0
          %1055 = vmatpush1.msra.mxu0 0.0
          %1056 = vmatprep.subr.mxu0 0.0
          %1057 = vmatpush1.msra.mxu0 0.0
          %1058 = vmatprep.mubr.f32.mxu0 0.0
          %1059 = vmatmul.mubr.f32.gmra.mrb[0].mxu0 %v882
          %v1060 = vpop.f32.mrb[0].mxu0
          %v1061 = vadd.f32 %v917, %v1060
          %v1062 = vpop.f32.mrb[0].mxu0
          %v1063 = vadd.f32 %v917, %v1062
          %1064 = vmatprep.mubr.f32.mxu0 0.0
          %1065 = vmatmul.mubr.f32.gmra.mrb[0].mxu0 %v883
          %v1066 = vpop.f32.mrb[0].mxu0
          %v1067 = vadd.f32 %v922, %v1066
          %v1068 = vpop.f32.mrb[0].mxu0
          %v1069 = vadd.f32 %v922, %v1068
          %1070 = vmatprep.mubr.f32.mxu0 0.0
          %1071 = vmatmul.mubr.f32.gmra.mrb[0].mxu0 %v884
          %v1072 = vpop.f32.mrb[0].mxu0
          %v1073 = vadd.f32 %v927, %v1072
          %v1074 = vpop.f32.mrb[0].mxu0
          %v1075 = vadd.f32 %v927, %v1074
          %1076 = vmatprep.mubr.f32.mxu0 0.0
          %1077 = vmatmul.mubr.f32.gmra.mrb[0].mxu0 %v885
          %v1078 = vpop.f32.mrb[0].mxu0
          %v1079 = vadd.f32 %v932, %v1078
          %v1080 = vpop.f32.mrb[0].mxu0
          %v1081 = vadd.f32 %v932, %v1080
          %1082 = vmatprep.mubr.f32.mxu0 0.0
          %1083 = vmatmul.mubr.f32.gmra.mrb[0].mxu0 %v886
          %v1084 = vpop.f32.mrb[0].mxu0
          %v1085 = vadd.f32 %v937, %v1084
          %v1086 = vpop.f32.mrb[0].mxu0
          %v1087 = vadd.f32 %v937, %v1086
          %1088 = vmatprep.mubr.f32.mxu0 0.0
          %1089 = vmatmul.mubr.f32.gmra.mrb[0].mxu0 %v887
          %v1090 = vpop.f32.mrb[0].mxu0
          %v1091 = vadd.f32 %v942, %v1090
          %v1092 = vpop.f32.mrb[0].mxu0
          %v1093 = vadd.f32 %v942, %v1092
          %1094 = vmatprep.mubr.f32.mxu0 0.0
          %1095 = vmatmul.mubr.f32.gmra.mrb[0].mxu0 %v888
          %v1096 = vpop.f32.mrb[0].mxu0
          %v1097 = vadd.f32 %v947, %v1096
          %v1098 = vpop.f32.mrb[0].mxu0
          %v1099 = vadd.f32 %v947, %v1098
          %1100 = vmatprep.mubr.f32.mxu0 0.0
          %1101 = vmatmul.mubr.f32.gmra.mrb[0].mxu0 %v889
          %v1102 = vpop.f32.mrb[0].mxu0
          %v1103 = vadd.f32 %v952, %v1102
          %v1104 = vpop.f32.mrb[0].mxu0
          %v1105 = vadd.f32 %v952, %v1104
          %1106 = vmatprep.mubr.f32.mxu0 0.0
          %1107 = vmatmul.mubr.f32.gmra.mrb[0].mxu0 %v890
          %v1108 = vpop.f32.mrb[0].mxu0
          %v1109 = vadd.f32 %v957, %v1108
          %v1110 = vpop.f32.mrb[0].mxu0
          %v1111 = vadd.f32 %v957, %v1110
          %1112 = vmatprep.mubr.f32.mxu0 0.0
          %1113 = vmatmul.mubr.f32.gmra.mrb[0].mxu0 %v891
          %v1114 = vpop.f32.mrb[0].mxu0
          %v1115 = vadd.f32 %v962, %v1114
          %v1116 = vpop.f32.mrb[0].mxu0
          %v1117 = vadd.f32 %v962, %v1116
          %1118 = vmatprep.mubr.f32.mxu0 0.0
          %1119 = vmatmul.mubr.f32.gmra.mrb[0].mxu0 %v892
          %v1120 = vpop.f32.mrb[0].mxu0
          %v1121 = vadd.f32 %v967, %v1120
          %v1122 = vpop.f32.mrb[0].mxu0
          %v1123 = vadd.f32 %v967, %v1122
          %1124 = vmatprep.mubr.f32.mxu0 0.0
          %1125 = vmatmul.mubr.f32.gmra.mrb[0].mxu0 %v893
          %v1126 = vpop.f32.mrb[0].mxu0
          %v1127 = vadd.f32 %v972, %v1126
          %v1128 = vpop.f32.mrb[0].mxu0
          %v1129 = vadd.f32 %v972, %v1128
          %1130 = vmatprep.mubr.f32.mxu0 0.0
          %1131 = vmatmul.mubr.f32.gmra.mrb[0].mxu0 %v894
          %v1132 = vpop.f32.mrb[0].mxu0
          %v1133 = vadd.f32 %v977, %v1132
          %v1134 = vpop.f32.mrb[0].mxu0
          %v1135 = vadd.f32 %v977, %v1134
          %1136 = vmatprep.mubr.f32.mxu0 0.0
          %1137 = vmatmul.mubr.f32.gmra.mrb[0].mxu0 %v895
          %v1138 = vpop.f32.mrb[0].mxu0
          %v1139 = vadd.f32 %v982, %v1138
          %v1140 = vpop.f32.mrb[0].mxu0
          %v1141 = vadd.f32 %v982, %v1140
          %1142 = vmatprep.mubr.f32.mxu0 0.0
          %1143 = vmatmul.mubr.f32.gmra.mrb[0].mxu0 %v896
          %v1144 = vpop.f32.mrb[0].mxu0
          %v1145 = vadd.f32 %v987, %v1144
          %v1146 = vpop.f32.mrb[0].mxu0
          %v1147 = vadd.f32 %v987, %v1146
          %1148 = vmatprep.mubr.f32.mxu0 0.0
          %1149 = vmatmul.mubr.f32.gmra.mrb[0].mxu0 %v897
          %v1150 = vpop.f32.mrb[0].mxu0
          %v1151 = vadd.f32 %v992, %v1150
          %v1152 = vpop.f32.mrb[0].mxu0
          %v1153 = vadd.f32 %v992, %v1152
          %1154 = vdwg.mxu0
          %v1155 = vmax.f32 %v1061, 0.0
          %v1156 = vmax.f32 %v1063, 0.0
          %v1157 = vmax.f32 %v1067, 0.0
          %v1158 = vmax.f32 %v1069, 0.0
          %v1159 = vmax.f32 %v1073, 0.0
          %v1160 = vmax.f32 %v1075, 0.0
          %v1161 = vmax.f32 %v1079, 0.0
          %v1162 = vmax.f32 %v1081, 0.0
          %v1163 = vmax.f32 %v1085, 0.0
          %v1164 = vmax.f32 %v1087, 0.0
          %v1165 = vmax.f32 %v1091, 0.0
          %v1166 = vmax.f32 %v1093, 0.0
          %v1167 = vmax.f32 %v1097, 0.0
          %v1168 = vmax.f32 %v1099, 0.0
          %v1169 = vmax.f32 %v1103, 0.0
          %v1170 = vmax.f32 %v1105, 0.0
          %v1171 = vmax.f32 %v1109, 0.0
          %v1172 = vmax.f32 %v1111, 0.0
          %v1173 = vmax.f32 %v1115, 0.0
          %v1174 = vmax.f32 %v1117, 0.0
          %v1175 = vmax.f32 %v1121, 0.0
          %v1176 = vmax.f32 %v1123, 0.0
          %v1177 = vmax.f32 %v1127, 0.0
          %v1178 = vmax.f32 %v1129, 0.0
          %v1179 = vmax.f32 %v1133, 0.0
          %v1180 = vmax.f32 %v1135, 0.0
          %v1181 = vmax.f32 %v1139, 0.0
          %v1182 = vmax.f32 %v1141, 0.0
          %v1183 = vmax.f32 %v1145, 0.0
          %v1184 = vmax.f32 %v1147, 0.0
          %v1185 = vmax.f32 %v1151, 0.0
          %v1186 = vmax.f32 %v1153, 0.0
          %v1187 = vmax.f32 %v1155, %v1156
          %1188 = vmax.xlane.f32.xlu0 %v1187
          %v1189 = vpop.xlane.xlu0 %1188
          %v1190 = vmax.f32 %v1157, %v1158
          %1191 = vmax.xlane.f32.xlu0 %v1190
          %v1192 = vpop.xlane.xlu0 %1191
          %v1193 = vmax.f32 %v1159, %v1160
          %1194 = vmax.xlane.f32.xlu0 %v1193
          %v1195 = vpop.xlane.xlu0 %1194
          %v1196 = vmax.f32 %v1161, %v1162
          %1197 = vmax.xlane.f32.xlu0 %v1196
          %v1198 = vpop.xlane.xlu0 %1197
          %v1199 = vmax.f32 %v1163, %v1164
          %1200 = vmax.xlane.f32.xlu0 %v1199
          %v1201 = vpop.xlane.xlu0 %1200
          %v1202 = vmax.f32 %v1165, %v1166
          %1203 = vmax.xlane.f32.xlu0 %v1202
          %v1204 = vpop.xlane.xlu0 %1203
          %v1205 = vmax.f32 %v1167, %v1168
          %1206 = vmax.xlane.f32.xlu0 %v1205
          %v1207 = vpop.xlane.xlu0 %1206
          %v1208 = vmax.f32 %v1169, %v1170
          %1209 = vmax.xlane.f32.xlu0 %v1208
          %v1210 = vpop.xlane.xlu0 %1209
          %v1211 = vmax.f32 %v1171, %v1172
          %1212 = vmax.xlane.f32.xlu0 %v1211
          %v1213 = vpop.xlane.xlu0 %1212
          %v1214 = vmax.f32 %v1173, %v1174
          %1215 = vmax.xlane.f32.xlu0 %v1214
          %v1216 = vpop.xlane.xlu0 %1215
          %v1217 = vmax.f32 %v1175, %v1176
          %1218 = vmax.xlane.f32.xlu0 %v1217
          %v1219 = vpop.xlane.xlu0 %1218
          %v1220 = vmax.f32 %v1177, %v1178
          %1221 = vmax.xlane.f32.xlu0 %v1220
          %v1222 = vpop.xlane.xlu0 %1221
          %v1223 = vmax.f32 %v1179, %v1180
          %1224 = vmax.xlane.f32.xlu0 %v1223
          %v1225 = vpop.xlane.xlu0 %1224
          %v1226 = vmax.f32 %v1181, %v1182
          %1227 = vmax.xlane.f32.xlu0 %v1226
          %v1228 = vpop.xlane.xlu0 %1227
          %v1229 = vmax.f32 %v1183, %v1184
          %1230 = vmax.xlane.f32.xlu0 %v1229
          %v1231 = vpop.xlane.xlu0 %1230
          %v1232 = vmax.f32 %v1185, %v1186
          %1233 = vmax.xlane.f32.xlu0 %v1232
          %v1234 = vpop.xlane.xlu0 %1233
          %v1235 = vld [vmem:[#allocation9] sm:$0xff]
          %v1236 = vld [vmem:[#allocation9 + $0x8] sm:$0xff]
          %v1237 = vld [vmem:[#allocation9 + $0x10] sm:$0xff]
          %v1238 = vld [vmem:[#allocation9 + $0x18] sm:$0xff]
          %v1239 = vld [vmem:[#allocation9 + $0x20] sm:$0xff]
          %v1240 = vld [vmem:[#allocation9 + $0x28] sm:$0xff]
          %v1241 = vld [vmem:[#allocation9 + $0x30] sm:$0xff]
          %v1242 = vld [vmem:[#allocation9 + $0x38] sm:$0xff]
          %v1243 = vld [vmem:[#allocation9 + $0x40] sm:$0xff]
          %v1244 = vld [vmem:[#allocation9 + $0x48] sm:$0xff]
          %v1245 = vld [vmem:[#allocation9 + $0x50] sm:$0xff]
          %v1246 = vld [vmem:[#allocation9 + $0x58] sm:$0xff]
          %v1247 = vld [vmem:[#allocation9 + $0x60] sm:$0xff]
          %v1248 = vld [vmem:[#allocation9 + $0x68] sm:$0xff]
          %v1249 = vld [vmem:[#allocation9 + $0x70] sm:$0xff]
          %v1250 = vld [vmem:[#allocation9 + $0x78] sm:$0xff]
          %v1251 = vld [vmem:[#allocation9 + $0x80] sm:$0xff]
          %v1252 = vld [vmem:[#allocation9 + $0x88] sm:$0xff]
          %v1253 = vld [vmem:[#allocation9 + $0x90] sm:$0xff]
          %v1254 = vld [vmem:[#allocation9 + $0x98] sm:$0xff]
          %v1255 = vld [vmem:[#allocation9 + $0xa0] sm:$0xff]
          %v1256 = vld [vmem:[#allocation9 + $0xa8] sm:$0xff]
          %v1257 = vld [vmem:[#allocation9 + $0xb0] sm:$0xff]
          %v1258 = vld [vmem:[#allocation9 + $0xb8] sm:$0xff]
          %v1259 = vld [vmem:[#allocation9 + $0xc0] sm:$0xff]
          %v1260 = vld [vmem:[#allocation9 + $0xc8] sm:$0xff]
          %v1261 = vld [vmem:[#allocation9 + $0xd0] sm:$0xff]
          %v1262 = vld [vmem:[#allocation9 + $0xd8] sm:$0xff]
          %v1263 = vld [vmem:[#allocation9 + $0xe0] sm:$0xff]
          %v1264 = vld [vmem:[#allocation9 + $0xe8] sm:$0xff]
          %v1265 = vld [vmem:[#allocation9 + $0xf0] sm:$0xff]
          %v1266 = vld [vmem:[#allocation9 + $0xf8] sm:$0xff]
          %v1267 = vld [vmem:[%s8] sm:$0xff]
          %v1268 = vld [vmem:[%s8 + $0x8] sm:$0xff]
          %v1269 = vld [vmem:[%s8 + $0x10] sm:$0xff]
          %v1270 = vld [vmem:[%s8 + $0x18] sm:$0xff]
          %v1271 = vld [vmem:[%s8 + $0x20] sm:$0xff]
          %v1272 = vld [vmem:[%s8 + $0x28] sm:$0xff]
          %v1273 = vld [vmem:[%s8 + $0x30] sm:$0xff]
          %v1274 = vld [vmem:[%s8 + $0x38] sm:$0xff]
          %v1275 = vld [vmem:[%s8 + $0x40] sm:$0xff]
          %v1276 = vld [vmem:[%s8 + $0x48] sm:$0xff]
          %v1277 = vld [vmem:[%s8 + $0x50] sm:$0xff]
          %v1278 = vld [vmem:[%s8 + $0x58] sm:$0xff]
          %v1279 = vld [vmem:[%s8 + $0x60] sm:$0xff]
          %v1280 = vld [vmem:[%s8 + $0x68] sm:$0xff]
          %v1281 = vld [vmem:[%s8 + $0x70] sm:$0xff]
          %v1282 = vld [vmem:[%s8 + $0x78] sm:$0xff]
          %v1283 = vld [vmem:[%s8 + $0x80] sm:$0xff]
          %v1284 = vld [vmem:[%s8 + $0x88] sm:$0xff]
          %v1285 = vld [vmem:[%s8 + $0x90] sm:$0xff]
          %v1286 = vld [vmem:[%s8 + $0x98] sm:$0xff]
          %v1287 = vld [vmem:[%s8 + $0xa0] sm:$0xff]
          %v1288 = vld [vmem:[%s8 + $0xa8] sm:$0xff]
          %v1289 = vld [vmem:[%s8 + $0xb0] sm:$0xff]
          %v1290 = vld [vmem:[%s8 + $0xb8] sm:$0xff]
          %v1291 = vld [vmem:[%s8 + $0xc0] sm:$0xff]
          %v1292 = vld [vmem:[%s8 + $0xc8] sm:$0xff]
          %v1293 = vld [vmem:[%s8 + $0xd0] sm:$0xff]
          %v1294 = vld [vmem:[%s8 + $0xd8] sm:$0xff]
          %v1295 = vld [vmem:[%s8 + $0xe0] sm:$0xff]
          %v1296 = vld [vmem:[%s8 + $0xe8] sm:$0xff]
          %v1297 = vld [vmem:[%s8 + $0xf0] sm:$0xff]
          %v1298 = vld [vmem:[%s8 + $0xf8] sm:$0xff]
          %1299 = vmatprep.subr.mxu0 0.0
          %1300 = vmatpush1.msra.mxu0 %v1189
          %1301 = vmatprep.subr.mxu0 0.0
          %1302 = vmatpush1.msra.mxu0 %v1192
          %1303 = vmatprep.subr.mxu0 0.0
          %1304 = vmatpush1.msra.mxu0 %v1195
          %1305 = vmatprep.subr.mxu0 0.0
          %1306 = vmatpush1.msra.mxu0 %v1198
          %1307 = vmatprep.subr.mxu0 0.0
          %1308 = vmatpush1.msra.mxu0 %v1201
          %1309 = vmatprep.subr.mxu0 0.0
          %1310 = vmatpush1.msra.mxu0 %v1204
          %1311 = vmatprep.subr.mxu0 0.0
          %1312 = vmatpush1.msra.mxu0 %v1207
          %1313 = vmatprep.subr.mxu0 0.0
          %1314 = vmatpush1.msra.mxu0 %v1210
          %1315 = vmatprep.subr.mxu0 0.0
          %1316 = vmatpush1.msra.mxu0 %v1213
          %1317 = vmatprep.subr.mxu0 0.0
          %1318 = vmatpush1.msra.mxu0 %v1216
          %1319 = vmatprep.subr.mxu0 0.0
          %1320 = vmatpush1.msra.mxu0 %v1219
          %1321 = vmatprep.subr.mxu0 0.0
          %1322 = vmatpush1.msra.mxu0 %v1222
          %1323 = vmatprep.subr.mxu0 0.0
          %1324 = vmatpush1.msra.mxu0 %v1225
          %1325 = vmatprep.subr.mxu0 0.0
          %1326 = vmatpush1.msra.mxu0 %v1228
          %1327 = vmatprep.subr.mxu0 0.0
          %1328 = vmatpush1.msra.mxu0 %v1231
          %1329 = vmatprep.subr.mxu0 0.0
          %1330 = vmatpush1.msra.mxu0 %v1234
          %1331 = vmatprep.subr.mxu0 0.0
          %1332 = vmatpush1.msra.mxu0 0.0
          %1333 = vmatprep.subr.mxu0 0.0
          %1334 = vmatpush1.msra.mxu0 0.0
          %1335 = vmatprep.subr.mxu0 0.0
          %1336 = vmatpush1.msra.mxu0 0.0
          %1337 = vmatprep.subr.mxu0 0.0
          %1338 = vmatpush1.msra.mxu0 0.0
          %1339 = vmatprep.subr.mxu0 0.0
          %1340 = vmatpush1.msra.mxu0 0.0
          %1341 = vmatprep.subr.mxu0 0.0
          %1342 = vmatpush1.msra.mxu0 0.0
          %1343 = vmatprep.subr.mxu0 0.0
          %1344 = vmatpush1.msra.mxu0 0.0
          %1345 = vmatprep.subr.mxu0 0.0
          %1346 = vmatpush1.msra.mxu0 0.0
          %1347 = vmatprep.subr.mxu0 0.0
          %1348 = vmatpush1.msra.mxu0 0.0
          %1349 = vmatprep.subr.mxu0 0.0
          %1350 = vmatpush1.msra.mxu0 0.0
          %1351 = vmatprep.subr.mxu0 0.0
          %1352 = vmatpush1.msra.mxu0 0.0
          %1353 = vmatprep.subr.mxu0 0.0
          %1354 = vmatpush1.msra.mxu0 0.0
          %1355 = vmatprep.subr.mxu0 0.0
          %1356 = vmatpush1.msra.mxu0 0.0
          %1357 = vmatprep.subr.mxu0 0.0
          %1358 = vmatpush1.msra.mxu0 0.0
          %1359 = vmatprep.subr.mxu0 0.0
          %1360 = vmatpush1.msra.mxu0 0.0
          %1361 = vmatprep.subr.mxu0 0.0
          %1362 = vmatpush1.msra.mxu0 0.0
          %1363 = vmatprep.mubr.f32.mxu0 0.0
          %1364 = vmatmul.mubr.f32.gmra.mrb[0].mxu0 %v1235
          %v1365 = vpop.f32.mrb[0].mxu0
          %v1366 = vadd.f32 %v1267, %v1365
          %v1367 = vpop.f32.mrb[0].mxu0
          %1368 = vmatprep.mubr.f32.mxu0 0.0
          %1369 = vmatmul.mubr.f32.gmra.mrb[0].mxu0 %v1236
          %v1370 = vpop.f32.mrb[0].mxu0
          %v1371 = vadd.f32 %v1268, %v1370
          %v1372 = vpop.f32.mrb[0].mxu0
          %1373 = vmatprep.mubr.f32.mxu0 0.0
          %1374 = vmatmul.mubr.f32.gmra.mrb[0].mxu0 %v1237
          %v1375 = vpop.f32.mrb[0].mxu0
          %v1376 = vadd.f32 %v1269, %v1375
          %v1377 = vpop.f32.mrb[0].mxu0
          %1378 = vmatprep.mubr.f32.mxu0 0.0
          %1379 = vmatmul.mubr.f32.gmra.mrb[0].mxu0 %v1238
          %v1380 = vpop.f32.mrb[0].mxu0
          %v1381 = vadd.f32 %v1270, %v1380
          %v1382 = vpop.f32.mrb[0].mxu0
          %1383 = vmatprep.mubr.f32.mxu0 0.0
          %1384 = vmatmul.mubr.f32.gmra.mrb[0].mxu0 %v1239
          %v1385 = vpop.f32.mrb[0].mxu0
          %v1386 = vadd.f32 %v1271, %v1385
          %v1387 = vpop.f32.mrb[0].mxu0
          %1388 = vmatprep.mubr.f32.mxu0 0.0
          %1389 = vmatmul.mubr.f32.gmra.mrb[0].mxu0 %v1240
          %v1390 = vpop.f32.mrb[0].mxu0
          %v1391 = vadd.f32 %v1272, %v1390
          %v1392 = vpop.f32.mrb[0].mxu0
          %1393 = vmatprep.mubr.f32.mxu0 0.0
          %1394 = vmatmul.mubr.f32.gmra.mrb[0].mxu0 %v1241
          %v1395 = vpop.f32.mrb[0].mxu0
          %v1396 = vadd.f32 %v1273, %v1395
          %v1397 = vpop.f32.mrb[0].mxu0
          %1398 = vmatprep.mubr.f32.mxu0 0.0
          %1399 = vmatmul.mubr.f32.gmra.mrb[0].mxu0 %v1242
          %v1400 = vpop.f32.mrb[0].mxu0
          %v1401 = vadd.f32 %v1274, %v1400
          %v1402 = vpop.f32.mrb[0].mxu0
          %1403 = vmatprep.mubr.f32.mxu0 0.0
          %1404 = vmatmul.mubr.f32.gmra.mrb[0].mxu0 %v1243
          %v1405 = vpop.f32.mrb[0].mxu0
          %v1406 = vadd.f32 %v1275, %v1405
          %v1407 = vpop.f32.mrb[0].mxu0
          %1408 = vmatprep.mubr.f32.mxu0 0.0
          %1409 = vmatmul.mubr.f32.gmra.mrb[0].mxu0 %v1244
          %v1410 = vpop.f32.mrb[0].mxu0
          %v1411 = vadd.f32 %v1276, %v1410
          %v1412 = vpop.f32.mrb[0].mxu0
          %1413 = vmatprep.mubr.f32.mxu0 0.0
          %1414 = vmatmul.mubr.f32.gmra.mrb[0].mxu0 %v1245
          %v1415 = vpop.f32.mrb[0].mxu0
          %v1416 = vadd.f32 %v1277, %v1415
          %v1417 = vpop.f32.mrb[0].mxu0
          %1418 = vmatprep.mubr.f32.mxu0 0.0
          %1419 = vmatmul.mubr.f32.gmra.mrb[0].mxu0 %v1246
          %v1420 = vpop.f32.mrb[0].mxu0
          %v1421 = vadd.f32 %v1278, %v1420
          %v1422 = vpop.f32.mrb[0].mxu0
          %1423 = vmatprep.mubr.f32.mxu0 0.0
          %1424 = vmatmul.mubr.f32.gmra.mrb[0].mxu0 %v1247
          %v1425 = vpop.f32.mrb[0].mxu0
          %v1426 = vadd.f32 %v1279, %v1425
          %v1427 = vpop.f32.mrb[0].mxu0
          %1428 = vmatprep.mubr.f32.mxu0 0.0
          %1429 = vmatmul.mubr.f32.gmra.mrb[0].mxu0 %v1248
          %v1430 = vpop.f32.mrb[0].mxu0
          %v1431 = vadd.f32 %v1280, %v1430
          %v1432 = vpop.f32.mrb[0].mxu0
          %1433 = vmatprep.mubr.f32.mxu0 0.0
          %1434 = vmatmul.mubr.f32.gmra.mrb[0].mxu0 %v1249
          %v1435 = vpop.f32.mrb[0].mxu0
          %v1436 = vadd.f32 %v1281, %v1435
          %v1437 = vpop.f32.mrb[0].mxu0
          %1438 = vmatprep.mubr.f32.mxu0 0.0
          %1439 = vmatmul.mubr.f32.gmra.mrb[0].mxu0 %v1250
          %v1440 = vpop.f32.mrb[0].mxu0
          %v1441 = vadd.f32 %v1282, %v1440
          %v1442 = vpop.f32.mrb[0].mxu0
          %1443 = vmatprep.mubr.f32.mxu0 0.0
          %1444 = vmatmul.mubr.f32.gmra.mrb[0].mxu0 %v1251
          %v1445 = vpop.f32.mrb[0].mxu0
          %v1446 = vadd.f32 %v1283, %v1445
          %v1447 = vpop.f32.mrb[0].mxu0
          %1448 = vmatprep.mubr.f32.mxu0 0.0
          %1449 = vmatmul.mubr.f32.gmra.mrb[0].mxu0 %v1252
          %v1450 = vpop.f32.mrb[0].mxu0
          %v1451 = vadd.f32 %v1284, %v1450
          %v1452 = vpop.f32.mrb[0].mxu0
          %1453 = vmatprep.mubr.f32.mxu0 0.0
          %1454 = vmatmul.mubr.f32.gmra.mrb[0].mxu0 %v1253
          %v1455 = vpop.f32.mrb[0].mxu0
          %v1456 = vadd.f32 %v1285, %v1455
          %v1457 = vpop.f32.mrb[0].mxu0
          %1458 = vmatprep.mubr.f32.mxu0 0.0
          %1459 = vmatmul.mubr.f32.gmra.mrb[0].mxu0 %v1254
          %v1460 = vpop.f32.mrb[0].mxu0
          %v1461 = vadd.f32 %v1286, %v1460
          %v1462 = vpop.f32.mrb[0].mxu0
          %1463 = vmatprep.mubr.f32.mxu0 0.0
          %1464 = vmatmul.mubr.f32.gmra.mrb[0].mxu0 %v1255
          %v1465 = vpop.f32.mrb[0].mxu0
          %v1466 = vadd.f32 %v1287, %v1465
          %v1467 = vpop.f32.mrb[0].mxu0
          %1468 = vmatprep.mubr.f32.mxu0 0.0
          %1469 = vmatmul.mubr.f32.gmra.mrb[0].mxu0 %v1256
          %v1470 = vpop.f32.mrb[0].mxu0
          %v1471 = vadd.f32 %v1288, %v1470
          %v1472 = vpop.f32.mrb[0].mxu0
          %1473 = vmatprep.mubr.f32.mxu0 0.0
          %1474 = vmatmul.mubr.f32.gmra.mrb[0].mxu0 %v1257
          %v1475 = vpop.f32.mrb[0].mxu0
          %v1476 = vadd.f32 %v1289, %v1475
          %v1477 = vpop.f32.mrb[0].mxu0
          %1478 = vmatprep.mubr.f32.mxu0 0.0
          %1479 = vmatmul.mubr.f32.gmra.mrb[0].mxu0 %v1258
          %v1480 = vpop.f32.mrb[0].mxu0
          %v1481 = vadd.f32 %v1290, %v1480
          %v1482 = vpop.f32.mrb[0].mxu0
          %1483 = vmatprep.mubr.f32.mxu0 0.0
          %1484 = vmatmul.mubr.f32.gmra.mrb[0].mxu0 %v1259
          %v1485 = vpop.f32.mrb[0].mxu0
          %v1486 = vadd.f32 %v1291, %v1485
          %v1487 = vpop.f32.mrb[0].mxu0
          %1488 = vmatprep.mubr.f32.mxu0 0.0
          %1489 = vmatmul.mubr.f32.gmra.mrb[0].mxu0 %v1260
          %v1490 = vpop.f32.mrb[0].mxu0
          %v1491 = vadd.f32 %v1292, %v1490
          %v1492 = vpop.f32.mrb[0].mxu0
          %1493 = vmatprep.mubr.f32.mxu0 0.0
          %1494 = vmatmul.mubr.f32.gmra.mrb[0].mxu0 %v1261
          %v1495 = vpop.f32.mrb[0].mxu0
          %v1496 = vadd.f32 %v1293, %v1495
          %v1497 = vpop.f32.mrb[0].mxu0
          %1498 = vmatprep.mubr.f32.mxu0 0.0
          %1499 = vmatmul.mubr.f32.gmra.mrb[0].mxu0 %v1262
          %v1500 = vpop.f32.mrb[0].mxu0
          %v1501 = vadd.f32 %v1294, %v1500
          %v1502 = vpop.f32.mrb[0].mxu0
          %1503 = vmatprep.mubr.f32.mxu0 0.0
          %1504 = vmatmul.mubr.f32.gmra.mrb[0].mxu0 %v1263
          %v1505 = vpop.f32.mrb[0].mxu0
          %v1506 = vadd.f32 %v1295, %v1505
          %v1507 = vpop.f32.mrb[0].mxu0
          %1508 = vmatprep.mubr.f32.mxu0 0.0
          %1509 = vmatmul.mubr.f32.gmra.mrb[0].mxu0 %v1264
          %v1510 = vpop.f32.mrb[0].mxu0
          %v1511 = vadd.f32 %v1296, %v1510
          %v1512 = vpop.f32.mrb[0].mxu0
          %1513 = vmatprep.mubr.f32.mxu0 0.0
          %1514 = vmatmul.mubr.f32.gmra.mrb[0].mxu0 %v1265
          %v1515 = vpop.f32.mrb[0].mxu0
          %v1516 = vadd.f32 %v1297, %v1515
          %v1517 = vpop.f32.mrb[0].mxu0
          %1518 = vmatprep.mubr.f32.mxu0 0.0
          %1519 = vmatmul.mubr.f32.gmra.mrb[0].mxu0 %v1266
          %v1520 = vpop.f32.mrb[0].mxu0
          %v1521 = vadd.f32 %v1298, %v1520
          %v1522 = vpop.f32.mrb[0].mxu0
          %1523 = vdwg.mxu0
          %vm1524 = vcmask 7168
          %1525 = vst.msk [vmem:[#allocation2] sm:$0xff] %vm1524, %v1366
          %1526 = vst.msk [vmem:[#allocation2 + $0x8] sm:$0xff] %vm1524, %v1371
          %1527 = vst.msk [vmem:[#allocation2 + $0x10] sm:$0xff] %vm1524, %v1376
          %1528 = vst.msk [vmem:[#allocation2 + $0x18] sm:$0xff] %vm1524, %v1381
          %1529 = vst.msk [vmem:[#allocation2 + $0x20] sm:$0xff] %vm1524, %v1386
          %1530 = vst.msk [vmem:[#allocation2 + $0x28] sm:$0xff] %vm1524, %v1391
          %1531 = vst.msk [vmem:[#allocation2 + $0x30] sm:$0xff] %vm1524, %v1396
          %1532 = vst.msk [vmem:[#allocation2 + $0x38] sm:$0xff] %vm1524, %v1401
          %1533 = vst.msk [vmem:[#allocation2 + $0x40] sm:$0xff] %vm1524, %v1406
          %1534 = vst.msk [vmem:[#allocation2 + $0x48] sm:$0xff] %vm1524, %v1411
          %1535 = vst.msk [vmem:[#allocation2 + $0x50] sm:$0xff] %vm1524, %v1416
          %1536 = vst.msk [vmem:[#allocation2 + $0x58] sm:$0xff] %vm1524, %v1421
          %1537 = vst.msk [vmem:[#allocation2 + $0x60] sm:$0xff] %vm1524, %v1426
          %1538 = vst.msk [vmem:[#allocation2 + $0x68] sm:$0xff] %vm1524, %v1431
          %1539 = vst.msk [vmem:[#allocation2 + $0x70] sm:$0xff] %vm1524, %v1436
          %1540 = vst.msk [vmem:[#allocation2 + $0x78] sm:$0xff] %vm1524, %v1441
          %1541 = vst.msk [vmem:[#allocation2 + $0x80] sm:$0xff] %vm1524, %v1446
          %1542 = vst.msk [vmem:[#allocation2 + $0x88] sm:$0xff] %vm1524, %v1451
          %1543 = vst.msk [vmem:[#allocation2 + $0x90] sm:$0xff] %vm1524, %v1456
          %1544 = vst.msk [vmem:[#allocation2 + $0x98] sm:$0xff] %vm1524, %v1461
          %1545 = vst.msk [vmem:[#allocation2 + $0xa0] sm:$0xff] %vm1524, %v1466
          %1546 = vst.msk [vmem:[#allocation2 + $0xa8] sm:$0xff] %vm1524, %v1471
          %1547 = vst.msk [vmem:[#allocation2 + $0xb0] sm:$0xff] %vm1524, %v1476
          %1548 = vst.msk [vmem:[#allocation2 + $0xb8] sm:$0xff] %vm1524, %v1481
          %1549 = vst.msk [vmem:[#allocation2 + $0xc0] sm:$0xff] %vm1524, %v1486
          %1550 = vst.msk [vmem:[#allocation2 + $0xc8] sm:$0xff] %vm1524, %v1491
          %1551 = vst.msk [vmem:[#allocation2 + $0xd0] sm:$0xff] %vm1524, %v1496
          %1552 = vst.msk [vmem:[#allocation2 + $0xd8] sm:$0xff] %vm1524, %v1501
          %1553 = vst.msk [vmem:[#allocation2 + $0xe0] sm:$0xff] %vm1524, %v1506
          %1554 = vst.msk [vmem:[#allocation2 + $0xe8] sm:$0xff] %vm1524, %v1511
          %1555 = vst.msk [vmem:[#allocation2 + $0xf0] sm:$0xff] %vm1524, %v1516
          %1556 = vst.msk [vmem:[#allocation2 + $0xf8] sm:$0xff] %vm1524, %v1521
        $region92: #{tpu_custom_call.1} parent=67 // pred_fallthru
          _
        %v1557 = vld [vmem:[%s538] sm:$0xff]
        %v1558 = vld [vmem:[%s538 + $0x8] sm:$0xff]
        %v1559 = vld [vmem:[%s538 + $0x10] sm:$0xff]
        %v1560 = vld [vmem:[%s538 + $0x18] sm:$0xff]
        %v1561 = vld [vmem:[%s538 + $0x20] sm:$0xff]
        %v1562 = vld [vmem:[%s538 + $0x28] sm:$0xff]
        %v1563 = vld [vmem:[%s538 + $0x30] sm:$0xff]
        %v1564 = vld [vmem:[%s538 + $0x38] sm:$0xff]
        %v1565 = vld [vmem:[%s538 + $0x40] sm:$0xff]
        %v1566 = vld [vmem:[%s538 + $0x48] sm:$0xff]
        %v1567 = vld [vmem:[%s538 + $0x50] sm:$0xff]
        %v1568 = vld [vmem:[%s538 + $0x58] sm:$0xff]
        %v1569 = vld [vmem:[%s538 + $0x60] sm:$0xff]
        %v1570 = vld [vmem:[%s538 + $0x68] sm:$0xff]
        %v1571 = vld [vmem:[%s538 + $0x70] sm:$0xff]
        %v1572 = vld [vmem:[%s538 + $0x78] sm:$0xff]
        %v1573 = vld [vmem:[%s538 + $0x80] sm:$0xff]
        %v1574 = vld [vmem:[%s538 + $0x88] sm:$0xff]
        %v1575 = vld [vmem:[%s538 + $0x90] sm:$0xff]
        %v1576 = vld [vmem:[%s538 + $0x98] sm:$0xff]
        %v1577 = vld [vmem:[%s538 + $0xa0] sm:$0xff]
        %v1578 = vld [vmem:[%s538 + $0xa8] sm:$0xff]
        %v1579 = vld [vmem:[%s538 + $0xb0] sm:$0xff]
        %v1580 = vld [vmem:[%s538 + $0xb8] sm:$0xff]
        %v1581 = vld [vmem:[%s538 + $0xc0] sm:$0xff]
        %v1582 = vld [vmem:[%s538 + $0xc8] sm:$0xff]
        %v1583 = vld [vmem:[%s538 + $0xd0] sm:$0xff]
        %v1584 = vld [vmem:[%s538 + $0xd8] sm:$0xff]
        %v1585 = vld [vmem:[%s538 + $0xe0] sm:$0xff]
        %v1586 = vld [vmem:[%s538 + $0xe8] sm:$0xff]
        %v1587 = vld [vmem:[%s538 + $0xf0] sm:$0xff]
        %v1588 = vld [vmem:[%s538 + $0xf8] sm:$0xff]
        %v1589 = vld [vmem:[%s6] sm:$0xff]
        %v1590 = vld [vmem:[%s6 + $0x8] sm:$0xff]
        %v1591 = vld [vmem:[%s6 + $0x10] sm:$0xff]
        %v1592 = vld [vmem:[%s6 + $0x18] sm:$0xff]
        %v1593 = vld [vmem:[%s6 + $0x20] sm:$0xff]
        %v1594 = vld [vmem:[%s6 + $0x28] sm:$0xff]
        %v1595 = vld [vmem:[%s6 + $0x30] sm:$0xff]
        %v1596 = vld [vmem:[%s6 + $0x38] sm:$0xff]
        %v1597 = vld [vmem:[%s6 + $0x40] sm:$0xff]
        %v1598 = vld [vmem:[%s6 + $0x48] sm:$0xff]
        %v1599 = vld [vmem:[%s6 + $0x50] sm:$0xff]
        %v1600 = vld [vmem:[%s6 + $0x58] sm:$0xff]
        %v1601 = vld [vmem:[%s6 + $0x60] sm:$0xff]
        %v1602 = vld [vmem:[%s6 + $0x68] sm:$0xff]
        %v1603 = vld [vmem:[%s6 + $0x70] sm:$0xff]
        %v1604 = vld [vmem:[%s6 + $0x78] sm:$0xff]
        %v1605 = vld [vmem:[%s6 + $0x80] sm:$0xff]
        %v1606 = vld [vmem:[%s6 + $0x88] sm:$0xff]
        %v1607 = vld [vmem:[%s6 + $0x90] sm:$0xff]
        %v1608 = vld [vmem:[%s6 + $0x98] sm:$0xff]
        %v1609 = vld [vmem:[%s6 + $0xa0] sm:$0xff]
        %v1610 = vld [vmem:[%s6 + $0xa8] sm:$0xff]
        %v1611 = vld [vmem:[%s6 + $0xb0] sm:$0xff]
        %v1612 = vld [vmem:[%s6 + $0xb8] sm:$0xff]
        %v1613 = vld [vmem:[%s6 + $0xc0] sm:$0xff]
        %v1614 = vld [vmem:[%s6 + $0xc8] sm:$0xff]
        %v1615 = vld [vmem:[%s6 + $0xd0] sm:$0xff]
        %v1616 = vld [vmem:[%s6 + $0xd8] sm:$0xff]
        %v1617 = vld [vmem:[%s6 + $0xe0] sm:$0xff]
        %v1618 = vld [vmem:[%s6 + $0xe8] sm:$0xff]
        %v1619 = vld [vmem:[%s6 + $0xf0] sm:$0xff]
        %v1620 = vld [vmem:[%s6 + $0xf8] sm:$0xff]
        %v1621 = vld [vmem:[#allocation2] sm:$0xff]
        %v1622 = vld [vmem:[#allocation2 + $0x8] sm:$0xff]
        %v1623 = vld [vmem:[#allocation2 + $0x10] sm:$0xff]
        %v1624 = vld [vmem:[#allocation2 + $0x18] sm:$0xff]
        %v1625 = vld [vmem:[#allocation2 + $0x20] sm:$0xff]
        %v1626 = vld [vmem:[#allocation2 + $0x28] sm:$0xff]
        %v1627 = vld [vmem:[#allocation2 + $0x30] sm:$0xff]
        %v1628 = vld [vmem:[#allocation2 + $0x38] sm:$0xff]
        %v1629 = vld [vmem:[#allocation2 + $0x40] sm:$0xff]
        %v1630 = vld [vmem:[#allocation2 + $0x48] sm:$0xff]
        %v1631 = vld [vmem:[#allocation2 + $0x50] sm:$0xff]
        %v1632 = vld [vmem:[#allocation2 + $0x58] sm:$0xff]
        %v1633 = vld [vmem:[#allocation2 + $0x60] sm:$0xff]
        %v1634 = vld [vmem:[#allocation2 + $0x68] sm:$0xff]
        %v1635 = vld [vmem:[#allocation2 + $0x70] sm:$0xff]
        %v1636 = vld [vmem:[#allocation2 + $0x78] sm:$0xff]
        %v1637 = vld [vmem:[#allocation2 + $0x80] sm:$0xff]
        %v1638 = vld [vmem:[#allocation2 + $0x88] sm:$0xff]
        %v1639 = vld [vmem:[#allocation2 + $0x90] sm:$0xff]
        %v1640 = vld [vmem:[#allocation2 + $0x98] sm:$0xff]
        %v1641 = vld [vmem:[#allocation2 + $0xa0] sm:$0xff]
        %v1642 = vld [vmem:[#allocation2 + $0xa8] sm:$0xff]
        %v1643 = vld [vmem:[#allocation2 + $0xb0] sm:$0xff]
        %v1644 = vld [vmem:[#allocation2 + $0xb8] sm:$0xff]
        %v1645 = vld [vmem:[#allocation2 + $0xc0] sm:$0xff]
        %v1646 = vld [vmem:[#allocation2 + $0xc8] sm:$0xff]
        %v1647 = vld [vmem:[#allocation2 + $0xd0] sm:$0xff]
        %v1648 = vld [vmem:[#allocation2 + $0xd8] sm:$0xff]
        %v1649 = vld [vmem:[#allocation2 + $0xe0] sm:$0xff]
        %v1650 = vld [vmem:[#allocation2 + $0xe8] sm:$0xff]
        %v1651 = vld [vmem:[#allocation2 + $0xf0] sm:$0xff]
        %v1652 = vld [vmem:[#allocation2 + $0xf8] sm:$0xff]
        %1654 = vset.pattern.permute.xlu0 0
        %1655 = vperm.xlu0 %1654, %v1621
        %v1656 = vpop.permute.xlu0 %1655
        %1659 = vset.pattern.permute.xlu0 0
        %1660 = vperm.xlu0 %1659, %v1622
        %v1661 = vpop.permute.xlu0 %1660
        %1664 = vset.pattern.permute.xlu0 0
        %1665 = vperm.xlu0 %1664, %v1623
        %v1666 = vpop.permute.xlu0 %1665
        %1669 = vset.pattern.permute.xlu0 0
        %1670 = vperm.xlu0 %1669, %v1624
        %v1671 = vpop.permute.xlu0 %1670
        %1674 = vset.pattern.permute.xlu0 0
        %1675 = vperm.xlu0 %1674, %v1625
        %v1676 = vpop.permute.xlu0 %1675
        %1679 = vset.pattern.permute.xlu0 0
        %1680 = vperm.xlu0 %1679, %v1626
        %v1681 = vpop.permute.xlu0 %1680
        %1684 = vset.pattern.permute.xlu0 0
        %1685 = vperm.xlu0 %1684, %v1627
        %v1686 = vpop.permute.xlu0 %1685
        %1689 = vset.pattern.permute.xlu0 0
        %1690 = vperm.xlu0 %1689, %v1628
        %v1691 = vpop.permute.xlu0 %1690
        %1694 = vset.pattern.permute.xlu0 0
        %1695 = vperm.xlu0 %1694, %v1629
        %v1696 = vpop.permute.xlu0 %1695
        %1699 = vset.pattern.permute.xlu0 0
        %1700 = vperm.xlu0 %1699, %v1630
        %v1701 = vpop.permute.xlu0 %1700
        %1704 = vset.pattern.permute.xlu0 0
        %1705 = vperm.xlu0 %1704, %v1631
        %v1706 = vpop.permute.xlu0 %1705
        %1709 = vset.pattern.permute.xlu0 0
        %1710 = vperm.xlu0 %1709, %v1632
        %v1711 = vpop.permute.xlu0 %1710
        %1714 = vset.pattern.permute.xlu0 0
        %1715 = vperm.xlu0 %1714, %v1633
        %v1716 = vpop.permute.xlu0 %1715
        %1719 = vset.pattern.permute.xlu0 0
        %1720 = vperm.xlu0 %1719, %v1634
        %v1721 = vpop.permute.xlu0 %1720
        %1724 = vset.pattern.permute.xlu0 0
        %1725 = vperm.xlu0 %1724, %v1635
        %v1726 = vpop.permute.xlu0 %1725
        %1729 = vset.pattern.permute.xlu0 0
        %1730 = vperm.xlu0 %1729, %v1636
        %v1731 = vpop.permute.xlu0 %1730
        %1734 = vset.pattern.permute.xlu0 0
        %1735 = vperm.xlu0 %1734, %v1637
        %v1736 = vpop.permute.xlu0 %1735
        %1739 = vset.pattern.permute.xlu0 0
        %1740 = vperm.xlu0 %1739, %v1638
        %v1741 = vpop.permute.xlu0 %1740
        %1744 = vset.pattern.permute.xlu0 0
        %1745 = vperm.xlu0 %1744, %v1639
        %v1746 = vpop.permute.xlu0 %1745
        %1749 = vset.pattern.permute.xlu0 0
        %1750 = vperm.xlu0 %1749, %v1640
        %v1751 = vpop.permute.xlu0 %1750
        %1754 = vset.pattern.permute.xlu0 0
        %1755 = vperm.xlu0 %1754, %v1641
        %v1756 = vpop.permute.xlu0 %1755
        %1759 = vset.pattern.permute.xlu0 0
        %1760 = vperm.xlu0 %1759, %v1642
        %v1761 = vpop.permute.xlu0 %1760
        %1764 = vset.pattern.permute.xlu0 0
        %1765 = vperm.xlu0 %1764, %v1643
        %v1766 = vpop.permute.xlu0 %1765
        %1769 = vset.pattern.permute.xlu0 0
        %1770 = vperm.xlu0 %1769, %v1644
        %v1771 = vpop.permute.xlu0 %1770
        %1774 = vset.pattern.permute.xlu0 0
        %1775 = vperm.xlu0 %1774, %v1645
        %v1776 = vpop.permute.xlu0 %1775
        %1779 = vset.pattern.permute.xlu0 0
        %1780 = vperm.xlu0 %1779, %v1646
        %v1781 = vpop.permute.xlu0 %1780
        %1784 = vset.pattern.permute.xlu0 0
        %1785 = vperm.xlu0 %1784, %v1647
        %v1786 = vpop.permute.xlu0 %1785
        %1789 = vset.pattern.permute.xlu0 0
        %1790 = vperm.xlu0 %1789, %v1648
        %v1791 = vpop.permute.xlu0 %1790
        %1794 = vset.pattern.permute.xlu0 0
        %1795 = vperm.xlu0 %1794, %v1649
        %v1796 = vpop.permute.xlu0 %1795
        %1799 = vset.pattern.permute.xlu0 0
        %1800 = vperm.xlu0 %1799, %v1650
        %v1801 = vpop.permute.xlu0 %1800
        %1804 = vset.pattern.permute.xlu0 0
        %1805 = vperm.xlu0 %1804, %v1651
        %v1806 = vpop.permute.xlu0 %1805
        %1809 = vset.pattern.permute.xlu0 0
        %1810 = vperm.xlu0 %1809, %v1652
        %v1811 = vpop.permute.xlu0 %1810
        %1813 = vmatprep.subr.mxu0 %v1558
        %1814 = vmatpush1.msra.mxu0 %v1557
        %1815 = vmatprep.subr.mxu0 %v1560
        %1816 = vmatpush1.msra.mxu0 %v1559
        %1817 = vmatprep.subr.mxu0 %v1562
        %1818 = vmatpush1.msra.mxu0 %v1561
        %1819 = vmatprep.subr.mxu0 %v1564
        %1820 = vmatpush1.msra.mxu0 %v1563
        %1821 = vmatprep.subr.mxu0 %v1566
        %1822 = vmatpush1.msra.mxu0 %v1565
        %1823 = vmatprep.subr.mxu0 %v1568
        %1824 = vmatpush1.msra.mxu0 %v1567
        %1825 = vmatprep.subr.mxu0 %v1570
        %1826 = vmatpush1.msra.mxu0 %v1569
        %1827 = vmatprep.subr.mxu0 %v1572
        %1828 = vmatpush1.msra.mxu0 %v1571
        %1829 = vmatprep.subr.mxu0 %v1574
        %1830 = vmatpush1.msra.mxu0 %v1573
        %1831 = vmatprep.subr.mxu0 %v1576
        %1832 = vmatpush1.msra.mxu0 %v1575
        %1833 = vmatprep.subr.mxu0 %v1578
        %1834 = vmatpush1.msra.mxu0 %v1577
        %1835 = vmatprep.subr.mxu0 %v1580
        %1836 = vmatpush1.msra.mxu0 %v1579
        %1837 = vmatprep.subr.mxu0 %v1582
        %1838 = vmatpush1.msra.mxu0 %v1581
        %1839 = vmatprep.subr.mxu0 %v1584
        %1840 = vmatpush1.msra.mxu0 %v1583
        %1841 = vmatprep.subr.mxu0 %v1586
        %1842 = vmatpush1.msra.mxu0 %v1585
        %1843 = vmatprep.subr.mxu0 %v1588
        %1844 = vmatpush1.msra.mxu0 %v1587
        %1845 = vmatprep.subr.mxu0 0.0
        %1846 = vmatpush1.msra.mxu0 0.0
        %1847 = vmatprep.subr.mxu0 0.0
        %1848 = vmatpush1.msra.mxu0 0.0
        %1849 = vmatprep.subr.mxu0 0.0
        %1850 = vmatpush1.msra.mxu0 0.0
        %1851 = vmatprep.subr.mxu0 0.0
        %1852 = vmatpush1.msra.mxu0 0.0
        %1853 = vmatprep.subr.mxu0 0.0
        %1854 = vmatpush1.msra.mxu0 0.0
        %1855 = vmatprep.subr.mxu0 0.0
        %1856 = vmatpush1.msra.mxu0 0.0
        %1857 = vmatprep.subr.mxu0 0.0
        %1858 = vmatpush1.msra.mxu0 0.0
        %1859 = vmatprep.subr.mxu0 0.0
        %1860 = vmatpush1.msra.mxu0 0.0
        %1861 = vmatprep.subr.mxu0 0.0
        %1862 = vmatpush1.msra.mxu0 0.0
        %1863 = vmatprep.subr.mxu0 0.0
        %1864 = vmatpush1.msra.mxu0 0.0
        %1865 = vmatprep.subr.mxu0 0.0
        %1866 = vmatpush1.msra.mxu0 0.0
        %1867 = vmatprep.subr.mxu0 0.0
        %1868 = vmatpush1.msra.mxu0 0.0
        %1869 = vmatprep.subr.mxu0 0.0
        %1870 = vmatpush1.msra.mxu0 0.0
        %1871 = vmatprep.subr.mxu0 0.0
        %1872 = vmatpush1.msra.mxu0 0.0
        %1873 = vmatprep.subr.mxu0 0.0
        %1874 = vmatpush1.msra.mxu0 0.0
        %1875 = vmatprep.subr.mxu0 0.0
        %1876 = vmatpush1.msra.mxu0 0.0
        %1877 = vmatprep.mubr.f32.mxu0 0.0
        %1878 = vmatmul.mubr.f32.gmra.mrb[0].mxu0 %v1589
        %v1879 = vpop.f32.mrb[0].mxu0
        %v1880 = vadd.f32 %v1656, %v1879
        %v1881 = vpop.f32.mrb[0].mxu0
        %v1882 = vadd.f32 %v1656, %v1881
        %1883 = vmatprep.mubr.f32.mxu0 0.0
        %1884 = vmatmul.mubr.f32.gmra.mrb[0].mxu0 %v1590
        %v1885 = vpop.f32.mrb[0].mxu0
        %v1886 = vadd.f32 %v1661, %v1885
        %v1887 = vpop.f32.mrb[0].mxu0
        %v1888 = vadd.f32 %v1661, %v1887
        %1889 = vmatprep.mubr.f32.mxu0 0.0
        %1890 = vmatmul.mubr.f32.gmra.mrb[0].mxu0 %v1591
        %v1891 = vpop.f32.mrb[0].mxu0
        %v1892 = vadd.f32 %v1666, %v1891
        %v1893 = vpop.f32.mrb[0].mxu0
        %v1894 = vadd.f32 %v1666, %v1893
        %1895 = vmatprep.mubr.f32.mxu0 0.0
        %1896 = vmatmul.mubr.f32.gmra.mrb[0].mxu0 %v1592
        %v1897 = vpop.f32.mrb[0].mxu0
        %v1898 = vadd.f32 %v1671, %v1897
        %v1899 = vpop.f32.mrb[0].mxu0
        %v1900 = vadd.f32 %v1671, %v1899
        %1901 = vmatprep.mubr.f32.mxu0 0.0
        %1902 = vmatmul.mubr.f32.gmra.mrb[0].mxu0 %v1593
        %v1903 = vpop.f32.mrb[0].mxu0
        %v1904 = vadd.f32 %v1676, %v1903
        %v1905 = vpop.f32.mrb[0].mxu0
        %v1906 = vadd.f32 %v1676, %v1905
        %1907 = vmatprep.mubr.f32.mxu0 0.0
        %1908 = vmatmul.mubr.f32.gmra.mrb[0].mxu0 %v1594
        %v1909 = vpop.f32.mrb[0].mxu0
        %v1910 = vadd.f32 %v1681, %v1909
        %v1911 = vpop.f32.mrb[0].mxu0
        %v1912 = vadd.f32 %v1681, %v1911
        %1913 = vmatprep.mubr.f32.mxu0 0.0
        %1914 = vmatmul.mubr.f32.gmra.mrb[0].mxu0 %v1595
        %v1915 = vpop.f32.mrb[0].mxu0
        %v1916 = vadd.f32 %v1686, %v1915
        %v1917 = vpop.f32.mrb[0].mxu0
        %v1918 = vadd.f32 %v1686, %v1917
        %1919 = vmatprep.mubr.f32.mxu0 0.0
        %1920 = vmatmul.mubr.f32.gmra.mrb[0].mxu0 %v1596
        %v1921 = vpop.f32.mrb[0].mxu0
        %v1922 = vadd.f32 %v1691, %v1921
        %v1923 = vpop.f32.mrb[0].mxu0
        %v1924 = vadd.f32 %v1691, %v1923
        %1925 = vmatprep.mubr.f32.mxu0 0.0
        %1926 = vmatmul.mubr.f32.gmra.mrb[0].mxu0 %v1597
        %v1927 = vpop.f32.mrb[0].mxu0
        %v1928 = vadd.f32 %v1696, %v1927
        %v1929 = vpop.f32.mrb[0].mxu0
        %v1930 = vadd.f32 %v1696, %v1929
        %1931 = vmatprep.mubr.f32.mxu0 0.0
        %1932 = vmatmul.mubr.f32.gmra.mrb[0].mxu0 %v1598
        %v1933 = vpop.f32.mrb[0].mxu0
        %v1934 = vadd.f32 %v1701, %v1933
        %v1935 = vpop.f32.mrb[0].mxu0
        %v1936 = vadd.f32 %v1701, %v1935
        %1937 = vmatprep.mubr.f32.mxu0 0.0
        %1938 = vmatmul.mubr.f32.gmra.mrb[0].mxu0 %v1599
        %v1939 = vpop.f32.mrb[0].mxu0
        %v1940 = vadd.f32 %v1706, %v1939
        %v1941 = vpop.f32.mrb[0].mxu0
        %v1942 = vadd.f32 %v1706, %v1941
        %1943 = vmatprep.mubr.f32.mxu0 0.0
        %1944 = vmatmul.mubr.f32.gmra.mrb[0].mxu0 %v1600
        %v1945 = vpop.f32.mrb[0].mxu0
        %v1946 = vadd.f32 %v1711, %v1945
        %v1947 = vpop.f32.mrb[0].mxu0
        %v1948 = vadd.f32 %v1711, %v1947
        %1949 = vmatprep.mubr.f32.mxu0 0.0
        %1950 = vmatmul.mubr.f32.gmra.mrb[0].mxu0 %v1601
        %v1951 = vpop.f32.mrb[0].mxu0
        %v1952 = vadd.f32 %v1716, %v1951
        %v1953 = vpop.f32.mrb[0].mxu0
        %v1954 = vadd.f32 %v1716, %v1953
        %1955 = vmatprep.mubr.f32.mxu0 0.0
        %1956 = vmatmul.mubr.f32.gmra.mrb[0].mxu0 %v1602
        %v1957 = vpop.f32.mrb[0].mxu0
        %v1958 = vadd.f32 %v1721, %v1957
        %v1959 = vpop.f32.mrb[0].mxu0
        %v1960 = vadd.f32 %v1721, %v1959
        %1961 = vmatprep.mubr.f32.mxu0 0.0
        %1962 = vmatmul.mubr.f32.gmra.mrb[0].mxu0 %v1603
        %v1963 = vpop.f32.mrb[0].mxu0
        %v1964 = vadd.f32 %v1726, %v1963
        %v1965 = vpop.f32.mrb[0].mxu0
        %v1966 = vadd.f32 %v1726, %v1965
        %1967 = vmatprep.mubr.f32.mxu0 0.0
        %1968 = vmatmul.mubr.f32.gmra.mrb[0].mxu0 %v1604
        %v1969 = vpop.f32.mrb[0].mxu0
        %v1970 = vadd.f32 %v1731, %v1969
        %v1971 = vpop.f32.mrb[0].mxu0
        %v1972 = vadd.f32 %v1731, %v1971
        %1973 = vmatprep.mubr.f32.mxu0 0.0
        %1974 = vmatmul.mubr.f32.gmra.mrb[0].mxu0 %v1605
        %v1975 = vpop.f32.mrb[0].mxu0
        %v1976 = vadd.f32 %v1736, %v1975
        %v1977 = vpop.f32.mrb[0].mxu0
        %v1978 = vadd.f32 %v1736, %v1977
        %1979 = vmatprep.mubr.f32.mxu0 0.0
        %1980 = vmatmul.mubr.f32.gmra.mrb[0].mxu0 %v1606
        %v1981 = vpop.f32.mrb[0].mxu0
        %v1982 = vadd.f32 %v1741, %v1981
        %v1983 = vpop.f32.mrb[0].mxu0
        %v1984 = vadd.f32 %v1741, %v1983
        %1985 = vmatprep.mubr.f32.mxu0 0.0
        %1986 = vmatmul.mubr.f32.gmra.mrb[0].mxu0 %v1607
        %v1987 = vpop.f32.mrb[0].mxu0
        %v1988 = vadd.f32 %v1746, %v1987
        %v1989 = vpop.f32.mrb[0].mxu0
        %v1990 = vadd.f32 %v1746, %v1989
        %1991 = vmatprep.mubr.f32.mxu0 0.0
        %1992 = vmatmul.mubr.f32.gmra.mrb[0].mxu0 %v1608
        %v1993 = vpop.f32.mrb[0].mxu0
        %v1994 = vadd.f32 %v1751, %v1993
        %v1995 = vpop.f32.mrb[0].mxu0
        %v1996 = vadd.f32 %v1751, %v1995
        %1997 = vmatprep.mubr.f32.mxu0 0.0
        %1998 = vmatmul.mubr.f32.gmra.mrb[0].mxu0 %v1609
        %v1999 = vpop.f32.mrb[0].mxu0
        %v2000 = vadd.f32 %v1756, %v1999
        %v2001 = vpop.f32.mrb[0].mxu0
        %v2002 = vadd.f32 %v1756, %v2001
        %2003 = vmatprep.mubr.f32.mxu0 0.0
        %2004 = vmatmul.mubr.f32.gmra.mrb[0].mxu0 %v1610
        %v2005 = vpop.f32.mrb[0].mxu0
        %v2006 = vadd.f32 %v1761, %v2005
        %v2007 = vpop.f32.mrb[0].mxu0
        %v2008 = vadd.f32 %v1761, %v2007
        %2009 = vmatprep.mubr.f32.mxu0 0.0
        %2010 = vmatmul.mubr.f32.gmra.mrb[0].mxu0 %v1611
        %v2011 = vpop.f32.mrb[0].mxu0
        %v2012 = vadd.f32 %v1766, %v2011
        %v2013 = vpop.f32.mrb[0].mxu0
        %v2014 = vadd.f32 %v1766, %v2013
        %2015 = vmatprep.mubr.f32.mxu0 0.0
        %2016 = vmatmul.mubr.f32.gmra.mrb[0].mxu0 %v1612
        %v2017 = vpop.f32.mrb[0].mxu0
        %v2018 = vadd.f32 %v1771, %v2017
        %v2019 = vpop.f32.mrb[0].mxu0
        %v2020 = vadd.f32 %v1771, %v2019
        %2021 = vmatprep.mubr.f32.mxu0 0.0
        %2022 = vmatmul.mubr.f32.gmra.mrb[0].mxu0 %v1613
        %v2023 = vpop.f32.mrb[0].mxu0
        %v2024 = vadd.f32 %v1776, %v2023
        %v2025 = vpop.f32.mrb[0].mxu0
        %v2026 = vadd.f32 %v1776, %v2025
        %2027 = vmatprep.mubr.f32.mxu0 0.0
        %2028 = vmatmul.mubr.f32.gmra.mrb[0].mxu0 %v1614
        %v2029 = vpop.f32.mrb[0].mxu0
        %v2030 = vadd.f32 %v1781, %v2029
        %v2031 = vpop.f32.mrb[0].mxu0
        %v2032 = vadd.f32 %v1781, %v2031
        %2033 = vmatprep.mubr.f32.mxu0 0.0
        %2034 = vmatmul.mubr.f32.gmra.mrb[0].mxu0 %v1615
        %v2035 = vpop.f32.mrb[0].mxu0
        %v2036 = vadd.f32 %v1786, %v2035
        %v2037 = vpop.f32.mrb[0].mxu0
        %v2038 = vadd.f32 %v1786, %v2037
        %2039 = vmatprep.mubr.f32.mxu0 0.0
        %2040 = vmatmul.mubr.f32.gmra.mrb[0].mxu0 %v1616
        %v2041 = vpop.f32.mrb[0].mxu0
        %v2042 = vadd.f32 %v1791, %v2041
        %v2043 = vpop.f32.mrb[0].mxu0
        %v2044 = vadd.f32 %v1791, %v2043
        %2045 = vmatprep.mubr.f32.mxu0 0.0
        %2046 = vmatmul.mubr.f32.gmra.mrb[0].mxu0 %v1617
        %v2047 = vpop.f32.mrb[0].mxu0
        %v2048 = vadd.f32 %v1796, %v2047
        %v2049 = vpop.f32.mrb[0].mxu0
        %v2050 = vadd.f32 %v1796, %v2049
        %2051 = vmatprep.mubr.f32.mxu0 0.0
        %2052 = vmatmul.mubr.f32.gmra.mrb[0].mxu0 %v1618
        %v2053 = vpop.f32.mrb[0].mxu0
        %v2054 = vadd.f32 %v1801, %v2053
        %v2055 = vpop.f32.mrb[0].mxu0
        %v2056 = vadd.f32 %v1801, %v2055
        %2057 = vmatprep.mubr.f32.mxu0 0.0
        %2058 = vmatmul.mubr.f32.gmra.mrb[0].mxu0 %v1619
        %v2059 = vpop.f32.mrb[0].mxu0
        %v2060 = vadd.f32 %v1806, %v2059
        %v2061 = vpop.f32.mrb[0].mxu0
        %v2062 = vadd.f32 %v1806, %v2061
        %2063 = vmatprep.mubr.f32.mxu0 0.0
        %2064 = vmatmul.mubr.f32.gmra.mrb[0].mxu0 %v1620
        %v2065 = vpop.f32.mrb[0].mxu0
        %v2066 = vadd.f32 %v1811, %v2065
        %v2067 = vpop.f32.mrb[0].mxu0
        %v2068 = vadd.f32 %v1811, %v2067
        %2069 = vdwg.mxu0
        %v2070 = vmax.f32 %v1880, 0.0
        %v2071 = vmax.f32 %v1882, 0.0
        %v2072 = vmax.f32 %v1886, 0.0
        %v2073 = vmax.f32 %v1888, 0.0
        %v2074 = vmax.f32 %v1892, 0.0
        %v2075 = vmax.f32 %v1894, 0.0
        %v2076 = vmax.f32 %v1898, 0.0
        %v2077 = vmax.f32 %v1900, 0.0
        %v2078 = vmax.f32 %v1904, 0.0
        %v2079 = vmax.f32 %v1906, 0.0
        %v2080 = vmax.f32 %v1910, 0.0
        %v2081 = vmax.f32 %v1912, 0.0
        %v2082 = vmax.f32 %v1916, 0.0
        %v2083 = vmax.f32 %v1918, 0.0
        %v2084 = vmax.f32 %v1922, 0.0
        %v2085 = vmax.f32 %v1924, 0.0
        %v2086 = vmax.f32 %v1928, 0.0
        %v2087 = vmax.f32 %v1930, 0.0
        %v2088 = vmax.f32 %v1934, 0.0
        %v2089 = vmax.f32 %v1936, 0.0
        %v2090 = vmax.f32 %v1940, 0.0
        %v2091 = vmax.f32 %v1942, 0.0
        %v2092 = vmax.f32 %v1946, 0.0
        %v2093 = vmax.f32 %v1948, 0.0
        %v2094 = vmax.f32 %v1952, 0.0
        %v2095 = vmax.f32 %v1954, 0.0
        %v2096 = vmax.f32 %v1958, 0.0
        %v2097 = vmax.f32 %v1960, 0.0
        %v2098 = vmax.f32 %v1964, 0.0
        %v2099 = vmax.f32 %v1966, 0.0
        %v2100 = vmax.f32 %v1970, 0.0
        %v2101 = vmax.f32 %v1972, 0.0
        %v2102 = vmax.f32 %v1976, 0.0
        %v2103 = vmax.f32 %v1978, 0.0
        %v2104 = vmax.f32 %v1982, 0.0
        %v2105 = vmax.f32 %v1984, 0.0
        %v2106 = vmax.f32 %v1988, 0.0
        %v2107 = vmax.f32 %v1990, 0.0
        %v2108 = vmax.f32 %v1994, 0.0
        %v2109 = vmax.f32 %v1996, 0.0
        %v2110 = vmax.f32 %v2000, 0.0
        %v2111 = vmax.f32 %v2002, 0.0
        %v2112 = vmax.f32 %v2006, 0.0
        %v2113 = vmax.f32 %v2008, 0.0
        %v2114 = vmax.f32 %v2012, 0.0
        %v2115 = vmax.f32 %v2014, 0.0
        %v2116 = vmax.f32 %v2018, 0.0
        %v2117 = vmax.f32 %v2020, 0.0
        %v2118 = vmax.f32 %v2024, 0.0
        %v2119 = vmax.f32 %v2026, 0.0
        %v2120 = vmax.f32 %v2030, 0.0
        %v2121 = vmax.f32 %v2032, 0.0
        %v2122 = vmax.f32 %v2036, 0.0
        %v2123 = vmax.f32 %v2038, 0.0
        %v2124 = vmax.f32 %v2042, 0.0
        %v2125 = vmax.f32 %v2044, 0.0
        %v2126 = vmax.f32 %v2048, 0.0
        %v2127 = vmax.f32 %v2050, 0.0
        %v2128 = vmax.f32 %v2054, 0.0
        %v2129 = vmax.f32 %v2056, 0.0
        %v2130 = vmax.f32 %v2060, 0.0
        %v2131 = vmax.f32 %v2062, 0.0
        %v2132 = vmax.f32 %v2066, 0.0
        %v2133 = vmax.f32 %v2068, 0.0
        %v2134 = vld [vmem:[#allocation11] sm:$0xff]
        %v2135 = vld [vmem:[#allocation11 + $0x8] sm:$0xff]
        %v2136 = vld [vmem:[#allocation11 + $0x10] sm:$0xff]
        %v2137 = vld [vmem:[#allocation11 + $0x18] sm:$0xff]
        %v2138 = vld [vmem:[#allocation11 + $0x20] sm:$0xff]
        %v2139 = vld [vmem:[#allocation11 + $0x28] sm:$0xff]
        %v2140 = vld [vmem:[#allocation11 + $0x30] sm:$0xff]
        %v2141 = vld [vmem:[#allocation11 + $0x38] sm:$0xff]
        %v2142 = vld [vmem:[#allocation11 + $0x40] sm:$0xff]
        %v2143 = vld [vmem:[#allocation11 + $0x48] sm:$0xff]
        %v2144 = vld [vmem:[#allocation11 + $0x50] sm:$0xff]
        %v2145 = vld [vmem:[#allocation11 + $0x58] sm:$0xff]
        %v2146 = vld [vmem:[#allocation11 + $0x60] sm:$0xff]
        %v2147 = vld [vmem:[#allocation11 + $0x68] sm:$0xff]
        %v2148 = vld [vmem:[#allocation11 + $0x70] sm:$0xff]
        %v2149 = vld [vmem:[#allocation11 + $0x78] sm:$0xff]
        %v2150 = vld [vmem:[#allocation11 + $0x80] sm:$0xff]
        %v2151 = vld [vmem:[#allocation11 + $0x88] sm:$0xff]
        %v2152 = vld [vmem:[#allocation11 + $0x90] sm:$0xff]
        %v2153 = vld [vmem:[#allocation11 + $0x98] sm:$0xff]
        %v2154 = vld [vmem:[#allocation11 + $0xa0] sm:$0xff]
        %v2155 = vld [vmem:[#allocation11 + $0xa8] sm:$0xff]
        %v2156 = vld [vmem:[#allocation11 + $0xb0] sm:$0xff]
        %v2157 = vld [vmem:[#allocation11 + $0xb8] sm:$0xff]
        %v2158 = vld [vmem:[#allocation11 + $0xc0] sm:$0xff]
        %v2159 = vld [vmem:[#allocation11 + $0xc8] sm:$0xff]
        %v2160 = vld [vmem:[#allocation11 + $0xd0] sm:$0xff]
        %v2161 = vld [vmem:[#allocation11 + $0xd8] sm:$0xff]
        %v2162 = vld [vmem:[#allocation11 + $0xe0] sm:$0xff]
        %v2163 = vld [vmem:[#allocation11 + $0xe8] sm:$0xff]
        %v2164 = vld [vmem:[#allocation11 + $0xf0] sm:$0xff]
        %v2165 = vld [vmem:[#allocation11 + $0xf8] sm:$0xff]
        %v2166 = vld [vmem:[%s10] sm:$0xff]
        %v2167 = vld [vmem:[%s10 + $0x8] sm:$0xff]
        %v2168 = vld [vmem:[%s10 + $0x10] sm:$0xff]
        %v2169 = vld [vmem:[%s10 + $0x18] sm:$0xff]
        %v2170 = vld [vmem:[%s10 + $0x20] sm:$0xff]
        %v2171 = vld [vmem:[%s10 + $0x28] sm:$0xff]
        %v2172 = vld [vmem:[%s10 + $0x30] sm:$0xff]
        %v2173 = vld [vmem:[%s10 + $0x38] sm:$0xff]
        %v2174 = vld [vmem:[%s10 + $0x40] sm:$0xff]
        %v2175 = vld [vmem:[%s10 + $0x48] sm:$0xff]
        %v2176 = vld [vmem:[%s10 + $0x50] sm:$0xff]
        %v2177 = vld [vmem:[%s10 + $0x58] sm:$0xff]
        %v2178 = vld [vmem:[%s10 + $0x60] sm:$0xff]
        %v2179 = vld [vmem:[%s10 + $0x68] sm:$0xff]
        %v2180 = vld [vmem:[%s10 + $0x70] sm:$0xff]
        %v2181 = vld [vmem:[%s10 + $0x78] sm:$0xff]
        %2183 = vset.pattern.permute.xlu0 0
        %2184 = vperm.xlu0 %2183, %v2166
        %v2185 = vpop.permute.xlu0 %2184
        %2188 = vset.pattern.permute.xlu0 0
        %2189 = vperm.xlu0 %2188, %v2167
        %v2190 = vpop.permute.xlu0 %2189
        %2193 = vset.pattern.permute.xlu0 0
        %2194 = vperm.xlu0 %2193, %v2168
        %v2195 = vpop.permute.xlu0 %2194
        %2198 = vset.pattern.permute.xlu0 0
        %2199 = vperm.xlu0 %2198, %v2169
        %v2200 = vpop.permute.xlu0 %2199
        %2203 = vset.pattern.permute.xlu0 0
        %2204 = vperm.xlu0 %2203, %v2170
        %v2205 = vpop.permute.xlu0 %2204
        %2208 = vset.pattern.permute.xlu0 0
        %2209 = vperm.xlu0 %2208, %v2171
        %v2210 = vpop.permute.xlu0 %2209
        %2213 = vset.pattern.permute.xlu0 0
        %2214 = vperm.xlu0 %2213, %v2172
        %v2215 = vpop.permute.xlu0 %2214
        %2218 = vset.pattern.permute.xlu0 0
        %2219 = vperm.xlu0 %2218, %v2173
        %v2220 = vpop.permute.xlu0 %2219
        %2223 = vset.pattern.permute.xlu0 0
        %2224 = vperm.xlu0 %2223, %v2174
        %v2225 = vpop.permute.xlu0 %2224
        %2228 = vset.pattern.permute.xlu0 0
        %2229 = vperm.xlu0 %2228, %v2175
        %v2230 = vpop.permute.xlu0 %2229
        %2233 = vset.pattern.permute.xlu0 0
        %2234 = vperm.xlu0 %2233, %v2176
        %v2235 = vpop.permute.xlu0 %2234
        %2238 = vset.pattern.permute.xlu0 0
        %2239 = vperm.xlu0 %2238, %v2177
        %v2240 = vpop.permute.xlu0 %2239
        %2243 = vset.pattern.permute.xlu0 0
        %2244 = vperm.xlu0 %2243, %v2178
        %v2245 = vpop.permute.xlu0 %2244
        %2248 = vset.pattern.permute.xlu0 0
        %2249 = vperm.xlu0 %2248, %v2179
        %v2250 = vpop.permute.xlu0 %2249
        %2253 = vset.pattern.permute.xlu0 0
        %2254 = vperm.xlu0 %2253, %v2180
        %v2255 = vpop.permute.xlu0 %2254
        %2258 = vset.pattern.permute.xlu0 0
        %2259 = vperm.xlu0 %2258, %v2181
        %v2260 = vpop.permute.xlu0 %2259
        %2262 = vmatprep.subr.mxu0 %v2071
        %2263 = vmatpush1.msra.mxu0 %v2070
        %2264 = vmatprep.subr.mxu0 %v2073
        %2265 = vmatpush1.msra.mxu0 %v2072
        %2266 = vmatprep.subr.mxu0 %v2075
        %2267 = vmatpush1.msra.mxu0 %v2074
        %2268 = vmatprep.subr.mxu0 %v2077
        %2269 = vmatpush1.msra.mxu0 %v2076
        %2270 = vmatprep.subr.mxu0 %v2079
        %2271 = vmatpush1.msra.mxu0 %v2078
        %2272 = vmatprep.subr.mxu0 %v2081
        %2273 = vmatpush1.msra.mxu0 %v2080
        %2274 = vmatprep.subr.mxu0 %v2083
        %2275 = vmatpush1.msra.mxu0 %v2082
        %2276 = vmatprep.subr.mxu0 %v2085
        %2277 = vmatpush1.msra.mxu0 %v2084
        %2278 = vmatprep.subr.mxu0 %v2087
        %2279 = vmatpush1.msra.mxu0 %v2086
        %2280 = vmatprep.subr.mxu0 %v2089
        %2281 = vmatpush1.msra.mxu0 %v2088
        %2282 = vmatprep.subr.mxu0 %v2091
        %2283 = vmatpush1.msra.mxu0 %v2090
        %2284 = vmatprep.subr.mxu0 %v2093
        %2285 = vmatpush1.msra.mxu0 %v2092
        %2286 = vmatprep.subr.mxu0 %v2095
        %2287 = vmatpush1.msra.mxu0 %v2094
        %2288 = vmatprep.subr.mxu0 %v2097
        %2289 = vmatpush1.msra.mxu0 %v2096
        %2290 = vmatprep.subr.mxu0 %v2099
        %2291 = vmatpush1.msra.mxu0 %v2098
        %2292 = vmatprep.subr.mxu0 %v2101
        %2293 = vmatpush1.msra.mxu0 %v2100
        %2294 = vmatprep.subr.mxu0 %v2103
        %2295 = vmatpush1.msra.mxu0 %v2102
        %2296 = vmatprep.subr.mxu0 %v2105
        %2297 = vmatpush1.msra.mxu0 %v2104
        %2298 = vmatprep.subr.mxu0 %v2107
        %2299 = vmatpush1.msra.mxu0 %v2106
        %2300 = vmatprep.subr.mxu0 %v2109
        %2301 = vmatpush1.msra.mxu0 %v2108
        %2302 = vmatprep.subr.mxu0 %v2111
        %2303 = vmatpush1.msra.mxu0 %v2110
        %2304 = vmatprep.subr.mxu0 %v2113
        %2305 = vmatpush1.msra.mxu0 %v2112
        %2306 = vmatprep.subr.mxu0 %v2115
        %2307 = vmatpush1.msra.mxu0 %v2114
        %2308 = vmatprep.subr.mxu0 %v2117
        %2309 = vmatpush1.msra.mxu0 %v2116
        %2310 = vmatprep.subr.mxu0 %v2119
        %2311 = vmatpush1.msra.mxu0 %v2118
        %2312 = vmatprep.subr.mxu0 %v2121
        %2313 = vmatpush1.msra.mxu0 %v2120
        %2314 = vmatprep.subr.mxu0 %v2123
        %2315 = vmatpush1.msra.mxu0 %v2122
        %2316 = vmatprep.subr.mxu0 %v2125
        %2317 = vmatpush1.msra.mxu0 %v2124
        %2318 = vmatprep.subr.mxu0 %v2127
        %2319 = vmatpush1.msra.mxu0 %v2126
        %2320 = vmatprep.subr.mxu0 %v2129
        %2321 = vmatpush1.msra.mxu0 %v2128
        %2322 = vmatprep.subr.mxu0 %v2131
        %2323 = vmatpush1.msra.mxu0 %v2130
        %2324 = vmatprep.subr.mxu0 %v2133
        %2325 = vmatpush1.msra.mxu0 %v2132
        %2326 = vmatprep.mubr.f32.mxu0 %v2135
        %2327 = vmatmul.mubr.f32.gmra.mrb[0].mxu0 %v2134
        %v2328 = vpop.f32.mrb[0].mxu0
        %v2329 = vadd.f32 %v2185, %v2328
        %v2330 = vpop.f32.mrb[0].mxu0
        %v2331 = vadd.f32 %v2185, %v2330
        %2332 = vmatprep.mubr.f32.mxu0 %v2137
        %2333 = vmatmul.mubr.f32.gmra.mrb[0].mxu0 %v2136
        %v2334 = vpop.f32.mrb[0].mxu0
        %v2335 = vadd.f32 %v2190, %v2334
        %v2336 = vpop.f32.mrb[0].mxu0
        %v2337 = vadd.f32 %v2190, %v2336
        %2338 = vmatprep.mubr.f32.mxu0 %v2139
        %2339 = vmatmul.mubr.f32.gmra.mrb[0].mxu0 %v2138
        %v2340 = vpop.f32.mrb[0].mxu0
        %v2341 = vadd.f32 %v2195, %v2340
        %v2342 = vpop.f32.mrb[0].mxu0
        %v2343 = vadd.f32 %v2195, %v2342
        %2344 = vmatprep.mubr.f32.mxu0 %v2141
        %2345 = vmatmul.mubr.f32.gmra.mrb[0].mxu0 %v2140
        %v2346 = vpop.f32.mrb[0].mxu0
        %v2347 = vadd.f32 %v2200, %v2346
        %v2348 = vpop.f32.mrb[0].mxu0
        %v2349 = vadd.f32 %v2200, %v2348
        %2350 = vmatprep.mubr.f32.mxu0 %v2143
        %2351 = vmatmul.mubr.f32.gmra.mrb[0].mxu0 %v2142
        %v2352 = vpop.f32.mrb[0].mxu0
        %v2353 = vadd.f32 %v2205, %v2352
        %v2354 = vpop.f32.mrb[0].mxu0
        %v2355 = vadd.f32 %v2205, %v2354
        %2356 = vmatprep.mubr.f32.mxu0 %v2145
        %2357 = vmatmul.mubr.f32.gmra.mrb[0].mxu0 %v2144
        %v2358 = vpop.f32.mrb[0].mxu0
        %v2359 = vadd.f32 %v2210, %v2358
        %v2360 = vpop.f32.mrb[0].mxu0
        %v2361 = vadd.f32 %v2210, %v2360
        %2362 = vmatprep.mubr.f32.mxu0 %v2147
        %2363 = vmatmul.mubr.f32.gmra.mrb[0].mxu0 %v2146
        %v2364 = vpop.f32.mrb[0].mxu0
        %v2365 = vadd.f32 %v2215, %v2364
        %v2366 = vpop.f32.mrb[0].mxu0
        %v2367 = vadd.f32 %v2215, %v2366
        %2368 = vmatprep.mubr.f32.mxu0 %v2149
        %2369 = vmatmul.mubr.f32.gmra.mrb[0].mxu0 %v2148
        %v2370 = vpop.f32.mrb[0].mxu0
        %v2371 = vadd.f32 %v2220, %v2370
        %v2372 = vpop.f32.mrb[0].mxu0
        %v2373 = vadd.f32 %v2220, %v2372
        %2374 = vmatprep.mubr.f32.mxu0 %v2151
        %2375 = vmatmul.mubr.f32.gmra.mrb[0].mxu0 %v2150
        %v2376 = vpop.f32.mrb[0].mxu0
        %v2377 = vadd.f32 %v2225, %v2376
        %v2378 = vpop.f32.mrb[0].mxu0
        %v2379 = vadd.f32 %v2225, %v2378
        %2380 = vmatprep.mubr.f32.mxu0 %v2153
        %2381 = vmatmul.mubr.f32.gmra.mrb[0].mxu0 %v2152
        %v2382 = vpop.f32.mrb[0].mxu0
        %v2383 = vadd.f32 %v2230, %v2382
        %v2384 = vpop.f32.mrb[0].mxu0
        %v2385 = vadd.f32 %v2230, %v2384
        %2386 = vmatprep.mubr.f32.mxu0 %v2155
        %2387 = vmatmul.mubr.f32.gmra.mrb[0].mxu0 %v2154
        %v2388 = vpop.f32.mrb[0].mxu0
        %v2389 = vadd.f32 %v2235, %v2388
        %v2390 = vpop.f32.mrb[0].mxu0
        %v2391 = vadd.f32 %v2235, %v2390
        %2392 = vmatprep.mubr.f32.mxu0 %v2157
        %2393 = vmatmul.mubr.f32.gmra.mrb[0].mxu0 %v2156
        %v2394 = vpop.f32.mrb[0].mxu0
        %v2395 = vadd.f32 %v2240, %v2394
        %v2396 = vpop.f32.mrb[0].mxu0
        %v2397 = vadd.f32 %v2240, %v2396
        %2398 = vmatprep.mubr.f32.mxu0 %v2159
        %2399 = vmatmul.mubr.f32.gmra.mrb[0].mxu0 %v2158
        %v2400 = vpop.f32.mrb[0].mxu0
        %v2401 = vadd.f32 %v2245, %v2400
        %v2402 = vpop.f32.mrb[0].mxu0
        %v2403 = vadd.f32 %v2245, %v2402
        %2404 = vmatprep.mubr.f32.mxu0 %v2161
        %2405 = vmatmul.mubr.f32.gmra.mrb[0].mxu0 %v2160
        %v2406 = vpop.f32.mrb[0].mxu0
        %v2407 = vadd.f32 %v2250, %v2406
        %v2408 = vpop.f32.mrb[0].mxu0
        %v2409 = vadd.f32 %v2250, %v2408
        %2410 = vmatprep.mubr.f32.mxu0 %v2163
        %2411 = vmatmul.mubr.f32.gmra.mrb[0].mxu0 %v2162
        %v2412 = vpop.f32.mrb[0].mxu0
        %v2413 = vadd.f32 %v2255, %v2412
        %v2414 = vpop.f32.mrb[0].mxu0
        %v2415 = vadd.f32 %v2255, %v2414
        %2416 = vmatprep.mubr.f32.mxu0 %v2165
        %2417 = vmatmul.mubr.f32.gmra.mrb[0].mxu0 %v2164
        %v2418 = vpop.f32.mrb[0].mxu0
        %v2419 = vadd.f32 %v2260, %v2418
        %v2420 = vpop.f32.mrb[0].mxu0
        %v2421 = vadd.f32 %v2260, %v2420
        %2422 = vdwg.mxu0
        %v2423 = vmax.f32 %v2329, 0.0
        %v2424 = vmax.f32 %v2331, 0.0
        %v2425 = vmax.f32 %v2335, 0.0
        %v2426 = vmax.f32 %v2337, 0.0
        %v2427 = vmax.f32 %v2341, 0.0
        %v2428 = vmax.f32 %v2343, 0.0
        %v2429 = vmax.f32 %v2347, 0.0
        %v2430 = vmax.f32 %v2349, 0.0
        %v2431 = vmax.f32 %v2353, 0.0
        %v2432 = vmax.f32 %v2355, 0.0
        %v2433 = vmax.f32 %v2359, 0.0
        %v2434 = vmax.f32 %v2361, 0.0
        %v2435 = vmax.f32 %v2365, 0.0
        %v2436 = vmax.f32 %v2367, 0.0
        %v2437 = vmax.f32 %v2371, 0.0
        %v2438 = vmax.f32 %v2373, 0.0
        %v2439 = vmax.f32 %v2377, 0.0
        %v2440 = vmax.f32 %v2379, 0.0
        %v2441 = vmax.f32 %v2383, 0.0
        %v2442 = vmax.f32 %v2385, 0.0
        %v2443 = vmax.f32 %v2389, 0.0
        %v2444 = vmax.f32 %v2391, 0.0
        %v2445 = vmax.f32 %v2395, 0.0
        %v2446 = vmax.f32 %v2397, 0.0
        %v2447 = vmax.f32 %v2401, 0.0
        %v2448 = vmax.f32 %v2403, 0.0
        %v2449 = vmax.f32 %v2407, 0.0
        %v2450 = vmax.f32 %v2409, 0.0
        %v2451 = vmax.f32 %v2413, 0.0
        %v2452 = vmax.f32 %v2415, 0.0
        %v2453 = vmax.f32 %v2419, 0.0
        %v2454 = vmax.f32 %v2421, 0.0
        %v2455 = vld [vmem:[%s11] sm:$0xff]
        %v2456 = vld [vmem:[%s11 + $0x8] sm:$0xff]
        %v2457 = vld [vmem:[%s11 + $0x10] sm:$0xff]
        %v2458 = vld [vmem:[%s11 + $0x18] sm:$0xff]
        %v2459 = vld [vmem:[%s11 + $0x20] sm:$0xff]
        %v2460 = vld [vmem:[%s11 + $0x28] sm:$0xff]
        %v2461 = vld [vmem:[%s11 + $0x30] sm:$0xff]
        %v2462 = vld [vmem:[%s11 + $0x38] sm:$0xff]
        %v2463 = vld [vmem:[%s11 + $0x40] sm:$0xff]
        %v2464 = vld [vmem:[%s11 + $0x48] sm:$0xff]
        %v2465 = vld [vmem:[%s11 + $0x50] sm:$0xff]
        %v2466 = vld [vmem:[%s11 + $0x58] sm:$0xff]
        %v2467 = vld [vmem:[%s11 + $0x60] sm:$0xff]
        %v2468 = vld [vmem:[%s11 + $0x68] sm:$0xff]
        %v2469 = vld [vmem:[%s11 + $0x70] sm:$0xff]
        %v2470 = vld [vmem:[%s11 + $0x78] sm:$0xff]
        %2472 = vset.pattern.permute.xlu0 0
        %2473 = vperm.xlu0 %2472, %v2455
        %v2474 = vpop.permute.xlu0 %2473
        %2477 = vset.pattern.permute.xlu0 0
        %2478 = vperm.xlu0 %2477, %v2456
        %v2479 = vpop.permute.xlu0 %2478
        %2482 = vset.pattern.permute.xlu0 0
        %2483 = vperm.xlu0 %2482, %v2457
        %v2484 = vpop.permute.xlu0 %2483
        %2487 = vset.pattern.permute.xlu0 0
        %2488 = vperm.xlu0 %2487, %v2458
        %v2489 = vpop.permute.xlu0 %2488
        %2492 = vset.pattern.permute.xlu0 0
        %2493 = vperm.xlu0 %2492, %v2459
        %v2494 = vpop.permute.xlu0 %2493
        %2497 = vset.pattern.permute.xlu0 0
        %2498 = vperm.xlu0 %2497, %v2460
        %v2499 = vpop.permute.xlu0 %2498
        %2502 = vset.pattern.permute.xlu0 0
        %2503 = vperm.xlu0 %2502, %v2461
        %v2504 = vpop.permute.xlu0 %2503
        %2507 = vset.pattern.permute.xlu0 0
        %2508 = vperm.xlu0 %2507, %v2462
        %v2509 = vpop.permute.xlu0 %2508
        %2512 = vset.pattern.permute.xlu0 0
        %2513 = vperm.xlu0 %2512, %v2463
        %v2514 = vpop.permute.xlu0 %2513
        %2517 = vset.pattern.permute.xlu0 0
        %2518 = vperm.xlu0 %2517, %v2464
        %v2519 = vpop.permute.xlu0 %2518
        %2522 = vset.pattern.permute.xlu0 0
        %2523 = vperm.xlu0 %2522, %v2465
        %v2524 = vpop.permute.xlu0 %2523
        %2527 = vset.pattern.permute.xlu0 0
        %2528 = vperm.xlu0 %2527, %v2466
        %v2529 = vpop.permute.xlu0 %2528
        %2532 = vset.pattern.permute.xlu0 0
        %2533 = vperm.xlu0 %2532, %v2467
        %v2534 = vpop.permute.xlu0 %2533
        %2537 = vset.pattern.permute.xlu0 0
        %2538 = vperm.xlu0 %2537, %v2468
        %v2539 = vpop.permute.xlu0 %2538
        %2542 = vset.pattern.permute.xlu0 0
        %2543 = vperm.xlu0 %2542, %v2469
        %v2544 = vpop.permute.xlu0 %2543
        %2547 = vset.pattern.permute.xlu0 0
        %2548 = vperm.xlu0 %2547, %v2470
        %v2549 = vpop.permute.xlu0 %2548
        %v2551 = vmul.f32 %v2423, %v2474
        %v2552 = vmul.f32 %v2424, %v2474
        %v2553 = vmul.f32 %v2425, %v2479
        %v2554 = vmul.f32 %v2426, %v2479
        %v2555 = vmul.f32 %v2427, %v2484
        %v2556 = vmul.f32 %v2428, %v2484
        %v2557 = vmul.f32 %v2429, %v2489
        %v2558 = vmul.f32 %v2430, %v2489
        %v2559 = vmul.f32 %v2431, %v2494
        %v2560 = vmul.f32 %v2432, %v2494
        %v2561 = vmul.f32 %v2433, %v2499
        %v2562 = vmul.f32 %v2434, %v2499
        %v2563 = vmul.f32 %v2435, %v2504
        %v2564 = vmul.f32 %v2436, %v2504
        %v2565 = vmul.f32 %v2437, %v2509
        %v2566 = vmul.f32 %v2438, %v2509
        %v2567 = vmul.f32 %v2439, %v2514
        %v2568 = vmul.f32 %v2440, %v2514
        %v2569 = vmul.f32 %v2441, %v2519
        %v2570 = vmul.f32 %v2442, %v2519
        %v2571 = vmul.f32 %v2443, %v2524
        %v2572 = vmul.f32 %v2444, %v2524
        %v2573 = vmul.f32 %v2445, %v2529
        %v2574 = vmul.f32 %v2446, %v2529
        %v2575 = vmul.f32 %v2447, %v2534
        %v2576 = vmul.f32 %v2448, %v2534
        %v2577 = vmul.f32 %v2449, %v2539
        %v2578 = vmul.f32 %v2450, %v2539
        %v2579 = vmul.f32 %v2451, %v2544
        %v2580 = vmul.f32 %v2452, %v2544
        %v2581 = vmul.f32 %v2453, %v2549
        %v2582 = vmul.f32 %v2454, %v2549
        %v2583 = vadd.f32 %v2551, %v2553
        %v2584 = vadd.f32 %v2583, %v2555
        %v2585 = vadd.f32 %v2584, %v2557
        %v2586 = vadd.f32 %v2585, %v2559
        %v2587 = vadd.f32 %v2586, %v2561
        %v2588 = vadd.f32 %v2587, %v2563
        %v2589 = vadd.f32 %v2588, %v2565
        %v2590 = vadd.f32 %v2589, %v2567
        %v2591 = vadd.f32 %v2590, %v2569
        %v2592 = vadd.f32 %v2591, %v2571
        %v2593 = vadd.f32 %v2592, %v2573
        %v2594 = vadd.f32 %v2593, %v2575
        %v2595 = vadd.f32 %v2594, %v2577
        %v2596 = vadd.f32 %v2595, %v2579
        %v2597 = vadd.f32 %v2596, %v2581
        %v2598 = vrot.slane %v2597, 4
        %v2599 = vadd.f32 %v2597, %v2598
        %v2600 = vrot.slane %v2599, 2
        %v2601 = vadd.f32 %v2599, %v2600
        %v2602 = vrot.slane %v2601, 1
        %v2603 = vadd.f32 %v2601, %v2602
        %v2604 = vadd.f32 %v2552, %v2554
        %v2605 = vadd.f32 %v2604, %v2556
        %v2606 = vadd.f32 %v2605, %v2558
        %v2607 = vadd.f32 %v2606, %v2560
        %v2608 = vadd.f32 %v2607, %v2562
        %v2609 = vadd.f32 %v2608, %v2564
        %v2610 = vadd.f32 %v2609, %v2566
        %v2611 = vadd.f32 %v2610, %v2568
        %v2612 = vadd.f32 %v2611, %v2570
        %v2613 = vadd.f32 %v2612, %v2572
        %v2614 = vadd.f32 %v2613, %v2574
        %v2615 = vadd.f32 %v2614, %v2576
        %v2616 = vadd.f32 %v2615, %v2578
        %v2617 = vadd.f32 %v2616, %v2580
        %v2618 = vadd.f32 %v2617, %v2582
        %v2619 = vrot.slane %v2618, 4
        %v2620 = vadd.f32 %v2618, %v2619
        %v2621 = vrot.slane %v2620, 2
        %v2622 = vadd.f32 %v2620, %v2621
        %v2623 = vrot.slane %v2622, 1
        %v2624 = vadd.f32 %v2622, %v2623
        %v2625 = vxor.u32 %v2603, 2147483648
        %v2626 = vxor.u32 %v2624, 2147483648
        %v2627 = vmul.f32 %v2625, 1.442695
        %v2628 = vpow.pop %v2627
        %v2629 = vmul.f32 %v2626, 1.442695
        %v2630 = vpow.pop %v2629
        %v2631 = vadd.f32 %v2628, 1.0
        %v2632 = vadd.f32 %v2630, 1.0
        %v2633 = vrcp.pop %v2631
        %v2634 = vmul.f32 1.0, %v2633
        %v2635 = vrcp.pop %v2632
        %v2636 = vmul.f32 1.0, %v2635
        %v2639 = vcombine.low %v2634, %v2636
        %v2641 = vunpack.c.l.s4 1966171168
        %v2642 = vunpack.c.0.s8 %v2641
        %v2643 = vlaneseq
        %v2644 = vshrl.u32 %v2643, 7
        %v2645 = vsub.s32 %v2642, %v2644
        %v2646 = vrot.slane %v2639, %v2645
        %v2648 = vunpack.c.l.s4 1966171168
        %v2649 = vunpack.c.0.s8 %v2648
        %v2650 = vlaneseq
        %v2651 = vshrl.u32 %v2650, 7
        %v2652 = vsub.s32 %v2649, %v2651
        %v2653 = vrot.slane %v2646, %v2652
        %v2655 = vlaneseq
        %vm2656 = vcmp.ge.s32.totalorder %v2655, 0
        %vm2657 = vcmp.lt.s32.totalorder %v2655, 256
        %vm2658 = vmand %vm2656, %vm2657
        %2659 = vst.msk [vmem:[%s529] sm:$0x3] %vm2658, %v2653
        %s2660 = sand.u32 %s317, 1
        %s2661 = scalar_lea.sflag [#allocation5], %s2660
        %s2662 = sand.u32 %s317, 1
        %s2663 = smul.addr %s2662, 2
        %s2664 = scalar_lea.vmem [#allocation12], %s2663
        // Predicated region
        $region93: #{tpu_custom_call.1} parent=67 // pred_check
          %p2665 = pneg %p327
        $region94: #{tpu_custom_call.1} parent=67 // pred_check_branch
          %2667 = sbr.rel (%p2665) target = $region96
        $region95: #{tpu_custom_call.1} parent=67 // pred_region
          %s2668 = smul.u32 2, %s36
          %s2670 = ssub.s32 32, 32
          %2671 = vsyncadd %s2661, %s2670
          %s2672 = smul.addr %s35, 2
          %s2673 = sadd.s32 %s2668, %s2672
          %s2674 = smul.addr %s2673, 16
          %s2675 = scalar_lea.hbm %s12, %s2674
          %s2677 = sshll.u32 %s2664, 4
          %s2678 = int_to_ptr.vmem [resolvable:$true] %s2677
          %2680 = dma.vmem_to_hbm [thread:$0]  %s2678, 32, %s2675, %s2661
        $region96: #{tpu_custom_call.1} parent=67 // pred_fallthru
          _
      $region68: #{tpu_custom_call.1} parent=5 // pred_fallthru
        _
      %p2681 = scmp.le.s32.totalorder 2, %s26
      // Predicated region
      $region97: #{tpu_custom_call.1} parent=5 // pred_check
        %p2682 = pneg %p2681
      $region98: #{tpu_custom_call.1} parent=5 // pred_check_branch
        %2684 = sbr.rel (%p2682) target = $region100
      $region99: #{tpu_custom_call.1} parent=5 // pred_region
        %s2685 = ssub.s32 %s26, 2
        // Predicated region
        $region101: #{tpu_custom_call.1} parent=99 // pred_check
          %p2686 = pneg %p333
        $region102: #{tpu_custom_call.1} parent=99 // pred_check_branch
          %2688 = sbr.rel (%p2686) target = $region104
        $region103: #{tpu_custom_call.1} parent=99 // pred_region
          %s2689 = sand.u32 %s318, 1
          %s2690 = scalar_lea.sflag [#allocation5], %s2689
          %s2691 = sand.u32 %s318, 1
          %s2692 = smul.addr %s2691, 2
          %s2693 = scalar_lea.vmem [#allocation12], %s2692
          %2694 = dma.done %s2690, 32
        $region104: #{tpu_custom_call.1} parent=99 // pred_fallthru
          _
      $region100: #{tpu_custom_call.1} parent=5 // pred_fallthru
        _
    $region6: #{tpu_custom_call.1} parent=1 // loop_footer
      %s30 = sadd.s32 1, %s26
    $region7: #{tpu_custom_call.1} parent=1 // loop_footer_branch
      %25 = sbr.rel target = $region3
    $region8: #{tpu_custom_call.1} parent=1 // loop_exit
      _
    %2695 = vsyncpa [#allocation4], 1
    %s2696 = scalar_lea.sflag [#allocation4], 1
    %2697 = vsyncpa %s2696, 1
    %2698 = vsyncpa [#allocation7], 1
    %2699 = vsyncpa [#allocation10], 1
    %2700 = vsyncpa [#allocation5], 1
    %s2701 = scalar_lea.sflag [#allocation5], 1
    %2702 = vsyncpa %s2701, 1

</llo_original>
